<compile_context>
chip_gen: v7x
topology: tpu7x:2x2x1
jax: 0.10.0
libtpu: 0.0.40
codegen_flags: <defaults>
</compile_context>

<pallas_src>
import functools

import jax
import jax.numpy as jnp
from jax.experimental import pallas as pl
from jax.experimental.pallas import tpu as pltpu


# ----------------------------- configuration -----------------------------
SEQ_LEN = 5                     # 15 hit features -> 5 hits x 3 coords
HIT_DIM = 3
EMB_DIM = 13                    # x[:, :, 15:] width
N_FEATURES = HIT_DIM + EMB_DIM           # LSTM input size (16)
FEAT_IN = SEQ_LEN * HIT_DIM + EMB_DIM    # raw feature columns per row (28)
N_HIDDEN = 1                    # LSTM num_layers and number of extra MLP blocks
HIDDEN_SIZE = 32
N_CLASSES = 4
HIDDEN_ACTIVATION = "ReLU"      # nn.<activation>
OUT_PAD = 128                   # lane-dense output width (last MLP layer padded)

_ACT = {"relu": lambda v: jnp.maximum(v, 0.0),
        "tanh": jnp.tanh,
        "sigmoid": jax.nn.sigmoid}
# Gate columns are packed direction-interleaved per gate, gate order (i, f, o, g):
#   [i_f | i_b | f_f | f_b | o_f | o_b | g_f | g_b], each H wide (8H = 256 total)
_GATE_SEQ = ("i", "f", "o", "g")


def _round_up(n, m):
    return (n + m - 1) // m * m


# ------------------------------ fused kernel ------------------------------
def _hits_lstm_kernel(*refs, n_layers, n_mlp):
    """Fused bidirectional-LSTM + MLP head for one (n_tile, FEAT_IN+1) row block.

    Ref order: x, [layer 0: wih_big, whh], [layer >0: wih, whh, bias],
               [per MLP layer: w, b], out.
      layer 0 : wih_big is the time-expanded (29, SEQ_LEN*8H) input weight with
                the combined bias folded into the trailing ones-column row.
      whh     : (2H, 8H) block-structured recurrent weight (fwd rows -> fwd gate
                cols, bwd rows -> bwd gate cols).
    """
    H = HIDDEN_SIZE
    T = SEQ_LEN
    H2 = 2 * H                                   # 64 : [fwd | bwd] hidden width
    G2 = 8 * H                                   # 256: packed gate width

    it = iter(refs)
    x_ref = next(it)
    lstm_w = []
    for li in range(n_layers):
        wih_ref = next(it)
        whh_ref = next(it)
        b_ref = next(it) if li > 0 else None     # layer-0 bias folded into wih
        lstm_w.append((wih_ref, whh_ref, b_ref))
    mlp_w = [(next(it), next(it)) for _ in range(n_mlp)]
    out_ref = next(it)

    N = x_ref.shape[0]
    act = _ACT[HIDDEN_ACTIVATION.lower()]

    def cell(pre, c):
        # pre: (N, 8H) f32, cols [i_f|i_b|f_f|f_b|o_f|o_b|g_f|g_b]; c: (N, 2H)
        sig = jax.nn.sigmoid(pre[:, :6 * H])     # one contiguous 192-wide push
        g = jnp.tanh(pre[:, 6 * H:])             # 64-wide tanh
        c_new = sig[:, H2:2 * H2] * c + sig[:, :H2] * g
        h_new = sig[:, 2 * H2:3 * H2] * jnp.tanh(c_new)
        return h_new, c_new

    layer_in = None
    h_fin0 = c_fin0 = None
    h_fin = c_fin = None
    h_steps = None

    for layer_idx, (wih_ref, whh_ref, b_ref) in enumerate(lstm_w):
        # ---- hoisted input projection, both directions, all timesteps -------
        if layer_idx == 0:
            # single lane-dense matmul; step s's 256-wide block already pairs
            # fwd(t=s) with bwd(t=T-1-s) and carries the folded bias (ones col).
            xp_all = jnp.dot(x_ref[...], wih_ref[...],
                             preferred_element_type=jnp.float32)
            pre_in = [xp_all[:, G2 * s:G2 * (s + 1)] for s in range(T)]
        else:
            wih = wih_ref[...]
            b = b_ref[...]
            xp = [jnp.dot(layer_in[t], wih,
                          preferred_element_type=jnp.float32) + b
                  for t in range(T)]
            # fwd gate columns read timestep s, bwd gate columns t = T-1-s
            fwd_gate_mask = (jax.lax.broadcasted_iota(
                jnp.int32, (1, G2), 1) // H) % 2 == 0
            pre_in = [jnp.where(fwd_gate_mask, xp[s], xp[T - 1 - s])
                      for s in range(T)]

        whh = whh_ref[...]                       # (2H, 8H) block structured
        h = jnp.zeros((N, H2), jnp.float32)
        c = jnp.zeros((N, H2), jnp.float32)
        h_steps = [None] * T
        for s in range(T):                       # T == 5, statically unrolled
            rec = jnp.dot(h.astype(jnp.bfloat16), whh,
                          preferred_element_type=jnp.float32)
            h, c = cell(pre_in[s] + rec, c)
            h_steps[s] = h

        if layer_idx == 0:
            h_fin0, c_fin0 = h, c                # layer-0 final states (hn[0], cn[0])
        h_fin, c_fin = h, c                      # last-layer final states

        if layer_idx + 1 < n_layers:
            # per-timestep outputs for the next layer: fwd half from step t,
            # bwd half from step T-1-t (only traced when n_layers > 1)
            fwd_half_mask = jax.lax.broadcasted_iota(jnp.int32, (1, H2), 1) < H
            layer_in = [jnp.where(fwd_half_mask, h_steps[t],
                                  h_steps[T - 1 - t]).astype(jnp.bfloat16)
                        for t in range(T)]

    # res = cat(output[-1], hn[-1], cn[-1], output[0], hn[0], cn[0]) -> (N, 8H)
    res = jnp.concatenate([
        h_fin[:, :H],          # output[-1] fwd : fwd h at t = T-1
        h_steps[0][:, H:],     # output[-1] bwd : bwd h at t = T-1 (step 0)
        h_fin[:, H:],          # hn[-1]         : last-layer bwd final h
        c_fin[:, H:],          # cn[-1]         : last-layer bwd final c
        h_steps[0][:, :H],     # output[0] fwd  : fwd h at t = 0
        h_fin[:, H:],          # output[0] bwd  : bwd h at t = 0 (= bwd final)
        h_fin0[:, :H],         # hn[0]          : layer-0 fwd final h
        c_fin0[:, :H],         # cn[0]          : layer-0 fwd final c
    ], axis=-1).astype(jnp.bfloat16)

    # ---- MLP head epilogue (weights VMEM resident) --------------------------
    y = res
    for i, (w_ref, bb_ref) in enumerate(mlp_w):
        y = jnp.dot(y, w_ref[...],
                    preferred_element_type=jnp.float32) + bb_ref[...]
        if i < n_mlp - 1:
            y = act(y).astype(jnp.bfloat16)
    out_ref[...] = y.astype(out_ref.dtype)       # (n_tile, 128) lane-dense store


# --------------------------- parameter packing -----------------------------
def _gate_blocks(w_pt):
    """PyTorch (4H, X) gate-stacked [i; f; g; o] -> per-gate (X, H) blocks."""
    H = HIDDEN_SIZE
    return {"i": w_pt[0 * H:1 * H].T, "f": w_pt[1 * H:2 * H].T,
            "g": w_pt[2 * H:3 * H].T, "o": w_pt[3 * H:4 * H].T}


def _interleave(fwd_pt, bwd_pt):
    """PyTorch (4H, X) fwd/bwd -> (X, 8H) cols [i_f|i_b|f_f|f_b|o_f|o_b|g_f|g_b]."""
    fb, bb = _gate_blocks(fwd_pt), _gate_blocks(bwd_pt)
    cols = []
    for g in _GATE_SEQ:
        cols += [fb[g], bb[g]]
    return jnp.concatenate(cols, axis=1)


def _pack_whh(whh_fwd_pt, whh_bwd_pt):
    """(2H, 8H) recurrent weight: [h_fwd | h_bwd] @ whh yields all packed gates."""
    H = HIDDEN_SIZE
    fb, bb = _gate_blocks(whh_fwd_pt), _gate_blocks(whh_bwd_pt)
    zero = jnp.zeros((H, H), whh_fwd_pt.dtype)
    cols = []
    for g in _GATE_SEQ:
        cols.append(jnp.concatenate([fb[g], zero], axis=0))   # fwd rows -> fwd cols
        cols.append(jnp.concatenate([zero, bb[g]], axis=0))   # bwd rows -> bwd cols
    return jnp.concatenate(cols, axis=1)


def _expand_layer0(wih, bias):
    """Time-expand the layer-0 input weight and fold the combined bias.

    wih  : (N_FEATURES, 8H) interleaved-gate input weight (rows: 3 hits + 13 emb)
    bias : (1, 8H) combined (b_ih + b_hh) interleaved bias
    Returns (FEAT_IN + 1, SEQ_LEN*8H); the last row multiplies the ones column.
    Step s's 256-wide column block pairs fwd(t=s) with bwd(t=T-1-s).
    """
    H = HIDDEN_SIZE
    G2 = wih.shape[1]
    fwd_col = ((jnp.arange(G2) // H) % 2 == 0)[None, :]       # fwd gate columns
    w_hit, w_emb = wih[:HIT_DIM], wih[HIT_DIM:]
    blocks = []
    for s in range(SEQ_LEN):
        tb = SEQ_LEN - 1 - s
        blk = jnp.zeros((FEAT_IN + 1, G2), wih.dtype)
        blk = blk.at[HIT_DIM * s:HIT_DIM * (s + 1)].add(
            jnp.where(fwd_col, w_hit, 0.0))                   # fwd reads hits at t=s
        blk = blk.at[HIT_DIM * tb:HIT_DIM * (tb + 1)].add(
            jnp.where(fwd_col, 0.0, w_hit))                   # bwd reads hits at T-1-s
        blk = blk.at[SEQ_LEN * HIT_DIM:SEQ_LEN * HIT_DIM + EMB_DIM].set(w_emb)
        blk = blk.at[FEAT_IN].set(bias[0])                    # ones-column row
        blocks.append(blk)
    return jnp.concatenate(blocks, axis=1)                    # (29, SEQ_LEN*8H)


def init_params(key):
    """Random parameters in PyTorch layout (gate rows stacked i, f, g, o)."""
    H = HIDDEN_SIZE
    lstm = []
    for li in range(N_HIDDEN):
        in_size = N_FEATURES if li == 0 else 2 * H
        key, *ks = jax.random.split(key, 9)
        layer = {}
        for d, off in (("fwd", 0), ("bwd", 4)):
            layer[f"w_ih_{d}"] = 0.1 * jax.random.normal(ks[off + 0], (4 * H, in_size))
            layer[f"w_hh_{d}"] = 0.1 * jax.random.normal(ks[off + 1], (4 * H, H))
            layer[f"b_ih_{d}"] = 0.1 * jax.random.normal(ks[off + 2], (4 * H,))
            layer[f"b_hh_{d}"] = 0.1 * jax.random.normal(ks[off + 3], (4 * H,))
        lstm.append(layer)
    # MLP head: Linear(8H,H)+act, N_HIDDEN x [Linear(H,H)+act], Linear(H,C)
    dims = [8 * H, H] + [H] * N_HIDDEN + [N_CLASSES]
    mlp = []
    for i in range(len(dims) - 1):
        key, kw, kb = jax.random.split(key, 3)
        mlp.append({"w": 0.1 * jax.random.normal(kw, (dims[i + 1], dims[i])),
                    "b": 0.1 * jax.random.normal(kb, (dims[i + 1],))})
    return {"lstm": lstm, "mlp": mlp}


def pack_params(params):
    """PyTorch-layout params -> flat tuple of kernel weights (host side, once)."""
    flat = []
    for li, layer in enumerate(params["lstm"]):
        wih = _interleave(layer["w_ih_fwd"], layer["w_ih_bwd"])          # (in, 8H)
        whh = _pack_whh(layer["w_hh_fwd"], layer["w_hh_bwd"])            # (2H, 8H)
        b_f = layer["b_ih_fwd"] + layer["b_hh_fwd"]
        b_b = layer["b_ih_bwd"] + layer["b_hh_bwd"]
        bias = _interleave(b_f[:, None], b_b[:, None])                   # (1, 8H)
        if li == 0:
            wih = _expand_layer0(wih, bias)                              # (29, T*8H)
            flat += [wih.astype(jnp.bfloat16), whh.astype(jnp.bfloat16)]
        else:
            flat += [wih.astype(jnp.bfloat16), whh.astype(jnp.bfloat16),
                     bias.astype(jnp.float32)]
    n_mlp = len(params["mlp"])
    for i, layer in enumerate(params["mlp"]):
        w = layer["w"].T                                                 # (in, out)
        b = layer["b"][None, :]
        if i == n_mlp - 1 and w.shape[1] < OUT_PAD:
            # lane-dense output store: pad the final projection to 128 lanes
            w = jnp.pad(w, ((0, 0), (0, OUT_PAD - w.shape[1])))
            b = jnp.pad(b, ((0, 0), (0, OUT_PAD - b.shape[1])))
        flat += [w.astype(jnp.bfloat16), b.astype(jnp.float32)]
    return tuple(flat)


# ------------------------------ forward pass ------------------------------
def _choose_tiling(n, max_tile):
    """Balanced row tiles (multiple of 8); >= 2 grid steps whenever n > 8 so the
    'parallel' axis shards across v7x's two TensorCores; padding capped at 7."""
    num_tiles = max(1, -(-n // max_tile))
    if num_tiles == 1 and n > 8:
        num_tiles = 2
    n_tile = _round_up(-(-n // num_tiles), 8)
    return n_tile, n_tile * num_tiles, num_tiles


def hits_lstm_forward(x, flat, *, max_tile=1024):
    B, Tr, F = x.shape
    assert F == FEAT_IN, (F, FEAT_IN)
    N = B * Tr
    n_tile, n_rows, num_tiles = _choose_tiling(N, max_tile)

    n_layers = N_HIDDEN
    n_mlp = N_HIDDEN + 2
    H = HIDDEN_SIZE

    # rows + trailing ones column (carries the folded layer-0 LSTM bias)
    xf = x.reshape(N, F).astype(jnp.bfloat16)
    xf = jnp.concatenate([xf, jnp.ones((N, 1), jnp.bfloat16)], axis=1)
    if n_rows != N:
        xf = jnp.pad(xf, ((0, n_rows - N), (0, 0)))

    in_specs = [pl.BlockSpec((n_tile, FEAT_IN + 1), lambda i: (i, 0))]
    # weights: full-array blocks, constant index_map -> VMEM resident
    in_specs += [pl.BlockSpec(w.shape, lambda i: (0, 0)) for w in flat]
    out_spec = pl.BlockSpec((n_tile, OUT_PAD), lambda i: (i, 0))

    # advisory cost estimate so XLA schedules/overlaps the call properly
    flops_row = 2 * (FEAT_IN + 1) * SEQ_LEN * 8 * H              # layer-0 projection
    flops_row += 2 * n_layers * SEQ_LEN * (2 * H) * (8 * H)      # recurrence
    flops_row += 2 * max(0, n_layers - 1) * SEQ_LEN * (2 * H) * (8 * H)
    mlp_dims = [8 * H, H] + [H] * N_HIDDEN + [OUT_PAD]
    flops_row += 2 * sum(mlp_dims[i] * mlp_dims[i + 1]
                         for i in range(len(mlp_dims) - 1))
    trans_row = n_layers * SEQ_LEN * 10 * H                      # sigmoid+2*tanh
    weight_bytes = sum(int(w.size) * w.dtype.itemsize for w in flat)
    cost = pl.CostEstimate(
        flops=n_rows * flops_row,
        transcendentals=n_rows * trans_row,
        bytes_accessed=n_rows * ((FEAT_IN + 1) * 2 + OUT_PAD * 4)
        + num_tiles * weight_bytes)

    kernel = functools.partial(_hits_lstm_kernel,
                               n_layers=n_layers, n_mlp=n_mlp)
    out = pl.pallas_call(
        kernel,
        grid=(num_tiles,),
        in_specs=in_specs,
        out_specs=out_spec,
        out_shape=jax.ShapeDtypeStruct((n_rows, OUT_PAD), jnp.float32),
        compiler_params=pltpu.CompilerParams(
            dimension_semantics=("parallel",),       # megacore / v7x 2-TC split
            vmem_limit_bytes=32 * 1024 * 1024),      # safe on v7x's 64 MiB VMEM
        cost_estimate=cost,
    )(xf, *flat)

    return out[:N, :N_CLASSES].reshape(B, Tr, N_CLASSES)


# ---------------------------------- main -----------------------------------
if __name__ == "__main__":
    key = jax.random.PRNGKey(0)
    kx, kp = jax.random.split(key)

    B, Tr = 2, 8
    x = jax.random.normal(kx, (B, Tr, FEAT_IN), jnp.float32)
    params = init_params(kp)
    flat = pack_params(params)

    fwd = jax.jit(hits_lstm_forward)
    out = jax.block_until_ready(fwd(x, flat))

    assert out.shape == (B, Tr, N_CLASSES), out.shape
    assert bool(jnp.all(jnp.isfinite(out)))
    print("KERNEL_OK")
</pallas_src>

<mosaic_0001>
module attributes {stable_mosaic.version = 11 : i64} {
  func.func @_hits_lstm_kernel(%arg0: i32, %arg1: memref<8x29xbf16, #tpu.memory_space<vmem>>, %arg2: memref<29x1280xbf16, #tpu.memory_space<vmem>>, %arg3: memref<64x256xbf16, #tpu.memory_space<vmem>>, %arg4: memref<256x32xbf16, #tpu.memory_space<vmem>>, %arg5: memref<1x32xf32, #tpu.memory_space<vmem>>, %arg6: memref<32x32xbf16, #tpu.memory_space<vmem>>, %arg7: memref<1x32xf32, #tpu.memory_space<vmem>>, %arg8: memref<32x128xbf16, #tpu.memory_space<vmem>>, %arg9: memref<1x128xf32, #tpu.memory_space<vmem>>, %arg10: memref<8x128xf32, #tpu.memory_space<vmem>>) attributes {dimension_semantics = [#tpu.dimension_semantics<parallel>], iteration_bounds = array<i64: 2>, scalar_prefetch = 0 : i64, scratch_operands = 0 : i64, tpu.core_type = #tpu.core_type<tc>, window_params = [{transform_indices = @transform_0, window_bounds = array<i64: 8, 29>}, {pipeline_mode = #tpu.pipeline_mode<synchronous>, transform_indices = @transform_1, window_bounds = array<i64: 29, 1280>}, {pipeline_mode = #tpu.pipeline_mode<synchronous>, transform_indices = @transform_2, window_bounds = array<i64: 64, 256>}, {pipeline_mode = #tpu.pipeline_mode<synchronous>, transform_indices = @transform_3, window_bounds = array<i64: 256, 32>}, {pipeline_mode = #tpu.pipeline_mode<synchronous>, transform_indices = @transform_4, window_bounds = array<i64: 1, 32>}, {pipeline_mode = #tpu.pipeline_mode<synchronous>, transform_indices = @transform_5, window_bounds = array<i64: 32, 32>}, {pipeline_mode = #tpu.pipeline_mode<synchronous>, transform_indices = @transform_6, window_bounds = array<i64: 1, 32>}, {pipeline_mode = #tpu.pipeline_mode<synchronous>, transform_indices = @transform_7, window_bounds = array<i64: 32, 128>}, {pipeline_mode = #tpu.pipeline_mode<synchronous>, transform_indices = @transform_8, window_bounds = array<i64: 1, 128>}, {transform_indices = @transform_9, window_bounds = array<i64: 8, 128>}]} {
    %c0 = arith.constant 0 : index
    %c0_0 = arith.constant 0 : index
    %0 = vector.load %arg1[%c0, %c0_0] : memref<8x29xbf16, #tpu.memory_space<vmem>>, vector<8x29xbf16>
    %c0_1 = arith.constant 0 : index
    %c0_2 = arith.constant 0 : index
    %1 = vector.load %arg2[%c0_1, %c0_2] : memref<29x1280xbf16, #tpu.memory_space<vmem>>, vector<29x1280xbf16>
    %cst = arith.constant dense<0.000000e+00> : vector<8x1280xf32>
    %2 = tpu.matmul %0, %1, %cst {dimension_numbers = #tpu.dot_dimension_numbers<[1], [0], [0], [1], [0, 0, 1, 1], [], []>} : vector<8x29xbf16>, vector<29x1280xbf16>, vector<8x1280xf32> -> vector<8x1280xf32>
    %3 = vector.extract_strided_slice %2 {offsets = [0, 0], sizes = [8, 256], strides = [1, 1]} : vector<8x1280xf32> to vector<8x256xf32>
    %4 = vector.extract_strided_slice %2 {offsets = [0, 256], sizes = [8, 256], strides = [1, 1]} : vector<8x1280xf32> to vector<8x256xf32>
    %5 = vector.extract_strided_slice %2 {offsets = [0, 512], sizes = [8, 256], strides = [1, 1]} : vector<8x1280xf32> to vector<8x256xf32>
    %6 = vector.extract_strided_slice %2 {offsets = [0, 768], sizes = [8, 256], strides = [1, 1]} : vector<8x1280xf32> to vector<8x256xf32>
    %7 = vector.extract_strided_slice %2 {offsets = [0, 1024], sizes = [8, 256], strides = [1, 1]} : vector<8x1280xf32> to vector<8x256xf32>
    %c0_3 = arith.constant 0 : index
    %c0_4 = arith.constant 0 : index
    %8 = vector.load %arg3[%c0_3, %c0_4] : memref<64x256xbf16, #tpu.memory_space<vmem>>, vector<64x256xbf16>
    %cst_5 = arith.constant 0.000000e+00 : f32
    %9 = vector.broadcast %cst_5 : f32 to vector<8x64xf32>
    %cst_6 = arith.constant 0.000000e+00 : f32
    %10 = vector.broadcast %cst_6 : f32 to vector<8x64xf32>
    %11 = arith.truncf %9 : vector<8x64xf32> to vector<8x64xbf16>
    %cst_7 = arith.constant dense<0.000000e+00> : vector<8x256xf32>
    %12 = tpu.matmul %11, %8, %cst_7 {dimension_numbers = #tpu.dot_dimension_numbers<[1], [0], [0], [1], [0, 0, 1, 1], [], []>} : vector<8x64xbf16>, vector<64x256xbf16>, vector<8x256xf32> -> vector<8x256xf32>
    %13 = arith.addf %3, %12 : vector<8x256xf32>
    %14 = vector.extract_strided_slice %13 {offsets = [0, 0], sizes = [8, 192], strides = [1, 1]} : vector<8x256xf32> to vector<8x192xf32>
    %15 = arith.negf %14 : vector<8x192xf32>
    %16 = math.exp %15 : vector<8x192xf32>
    %cst_8 = arith.constant 1.000000e+00 : f32
    %17 = vector.broadcast %cst_8 : f32 to vector<8x192xf32>
    %18 = arith.addf %17, %16 : vector<8x192xf32>
    %19 = arith.divf %17, %18 : vector<8x192xf32>
    %20 = vector.extract_strided_slice %13 {offsets = [0, 192], sizes = [8, 64], strides = [1, 1]} : vector<8x256xf32> to vector<8x64xf32>
    %21 = math.tanh %20 : vector<8x64xf32>
    %22 = vector.extract_strided_slice %19 {offsets = [0, 64], sizes = [8, 64], strides = [1, 1]} : vector<8x192xf32> to vector<8x64xf32>
    %23 = arith.mulf %22, %10 : vector<8x64xf32>
    %24 = vector.extract_strided_slice %19 {offsets = [0, 0], sizes = [8, 64], strides = [1, 1]} : vector<8x192xf32> to vector<8x64xf32>
    %25 = arith.mulf %24, %21 : vector<8x64xf32>
    %26 = arith.addf %23, %25 : vector<8x64xf32>
    %27 = vector.extract_strided_slice %19 {offsets = [0, 128], sizes = [8, 64], strides = [1, 1]} : vector<8x192xf32> to vector<8x64xf32>
    %28 = math.tanh %26 : vector<8x64xf32>
    %29 = arith.mulf %27, %28 : vector<8x64xf32>
    %30 = arith.truncf %29 : vector<8x64xf32> to vector<8x64xbf16>
    %cst_9 = arith.constant dense<0.000000e+00> : vector<8x256xf32>
    %31 = tpu.matmul %30, %8, %cst_9 {dimension_numbers = #tpu.dot_dimension_numbers<[1], [0], [0], [1], [0, 0, 1, 1], [], []>} : vector<8x64xbf16>, vector<64x256xbf16>, vector<8x256xf32> -> vector<8x256xf32>
    %32 = arith.addf %4, %31 : vector<8x256xf32>
    %33 = vector.extract_strided_slice %32 {offsets = [0, 0], sizes = [8, 192], strides = [1, 1]} : vector<8x256xf32> to vector<8x192xf32>
    %34 = arith.negf %33 : vector<8x192xf32>
    %35 = math.exp %34 : vector<8x192xf32>
    %cst_10 = arith.constant 1.000000e+00 : f32
    %36 = vector.broadcast %cst_10 : f32 to vector<8x192xf32>
    %37 = arith.addf %36, %35 : vector<8x192xf32>
    %38 = arith.divf %36, %37 : vector<8x192xf32>
    %39 = vector.extract_strided_slice %32 {offsets = [0, 192], sizes = [8, 64], strides = [1, 1]} : vector<8x256xf32> to vector<8x64xf32>
    %40 = math.tanh %39 : vector<8x64xf32>
    %41 = vector.extract_strided_slice %38 {offsets = [0, 64], sizes = [8, 64], strides = [1, 1]} : vector<8x192xf32> to vector<8x64xf32>
    %42 = arith.mulf %41, %26 : vector<8x64xf32>
    %43 = vector.extract_strided_slice %38 {offsets = [0, 0], sizes = [8, 64], strides = [1, 1]} : vector<8x192xf32> to vector<8x64xf32>
    %44 = arith.mulf %43, %40 : vector<8x64xf32>
    %45 = arith.addf %42, %44 : vector<8x64xf32>
    %46 = vector.extract_strided_slice %38 {offsets = [0, 128], sizes = [8, 64], strides = [1, 1]} : vector<8x192xf32> to vector<8x64xf32>
    %47 = math.tanh %45 : vector<8x64xf32>
    %48 = arith.mulf %46, %47 : vector<8x64xf32>
    %49 = arith.truncf %48 : vector<8x64xf32> to vector<8x64xbf16>
    %cst_11 = arith.constant dense<0.000000e+00> : vector<8x256xf32>
    %50 = tpu.matmul %49, %8, %cst_11 {dimension_numbers = #tpu.dot_dimension_numbers<[1], [0], [0], [1], [0, 0, 1, 1], [], []>} : vector<8x64xbf16>, vector<64x256xbf16>, vector<8x256xf32> -> vector<8x256xf32>
    %51 = arith.addf %5, %50 : vector<8x256xf32>
    %52 = vector.extract_strided_slice %51 {offsets = [0, 0], sizes = [8, 192], strides = [1, 1]} : vector<8x256xf32> to vector<8x192xf32>
    %53 = arith.negf %52 : vector<8x192xf32>
    %54 = math.exp %53 : vector<8x192xf32>
    %cst_12 = arith.constant 1.000000e+00 : f32
    %55 = vector.broadcast %cst_12 : f32 to vector<8x192xf32>
    %56 = arith.addf %55, %54 : vector<8x192xf32>
    %57 = arith.divf %55, %56 : vector<8x192xf32>
    %58 = vector.extract_strided_slice %51 {offsets = [0, 192], sizes = [8, 64], strides = [1, 1]} : vector<8x256xf32> to vector<8x64xf32>
    %59 = math.tanh %58 : vector<8x64xf32>
    %60 = vector.extract_strided_slice %57 {offsets = [0, 64], sizes = [8, 64], strides = [1, 1]} : vector<8x192xf32> to vector<8x64xf32>
    %61 = arith.mulf %60, %45 : vector<8x64xf32>
    %62 = vector.extract_strided_slice %57 {offsets = [0, 0], sizes = [8, 64], strides = [1, 1]} : vector<8x192xf32> to vector<8x64xf32>
    %63 = arith.mulf %62, %59 : vector<8x64xf32>
    %64 = arith.addf %61, %63 : vector<8x64xf32>
    %65 = vector.extract_strided_slice %57 {offsets = [0, 128], sizes = [8, 64], strides = [1, 1]} : vector<8x192xf32> to vector<8x64xf32>
    %66 = math.tanh %64 : vector<8x64xf32>
    %67 = arith.mulf %65, %66 : vector<8x64xf32>
    %68 = arith.truncf %67 : vector<8x64xf32> to vector<8x64xbf16>
    %cst_13 = arith.constant dense<0.000000e+00> : vector<8x256xf32>
    %69 = tpu.matmul %68, %8, %cst_13 {dimension_numbers = #tpu.dot_dimension_numbers<[1], [0], [0], [1], [0, 0, 1, 1], [], []>} : vector<8x64xbf16>, vector<64x256xbf16>, vector<8x256xf32> -> vector<8x256xf32>
    %70 = arith.addf %6, %69 : vector<8x256xf32>
    %71 = vector.extract_strided_slice %70 {offsets = [0, 0], sizes = [8, 192], strides = [1, 1]} : vector<8x256xf32> to vector<8x192xf32>
    %72 = arith.negf %71 : vector<8x192xf32>
    %73 = math.exp %72 : vector<8x192xf32>
    %cst_14 = arith.constant 1.000000e+00 : f32
    %74 = vector.broadcast %cst_14 : f32 to vector<8x192xf32>
    %75 = arith.addf %74, %73 : vector<8x192xf32>
    %76 = arith.divf %74, %75 : vector<8x192xf32>
    %77 = vector.extract_strided_slice %70 {offsets = [0, 192], sizes = [8, 64], strides = [1, 1]} : vector<8x256xf32> to vector<8x64xf32>
    %78 = math.tanh %77 : vector<8x64xf32>
    %79 = vector.extract_strided_slice %76 {offsets = [0, 64], sizes = [8, 64], strides = [1, 1]} : vector<8x192xf32> to vector<8x64xf32>
    %80 = arith.mulf %79, %64 : vector<8x64xf32>
    %81 = vector.extract_strided_slice %76 {offsets = [0, 0], sizes = [8, 64], strides = [1, 1]} : vector<8x192xf32> to vector<8x64xf32>
    %82 = arith.mulf %81, %78 : vector<8x64xf32>
    %83 = arith.addf %80, %82 : vector<8x64xf32>
    %84 = vector.extract_strided_slice %76 {offsets = [0, 128], sizes = [8, 64], strides = [1, 1]} : vector<8x192xf32> to vector<8x64xf32>
    %85 = math.tanh %83 : vector<8x64xf32>
    %86 = arith.mulf %84, %85 : vector<8x64xf32>
    %87 = arith.truncf %86 : vector<8x64xf32> to vector<8x64xbf16>
    %cst_15 = arith.constant dense<0.000000e+00> : vector<8x256xf32>
    %88 = tpu.matmul %87, %8, %cst_15 {dimension_numbers = #tpu.dot_dimension_numbers<[1], [0], [0], [1], [0, 0, 1, 1], [], []>} : vector<8x64xbf16>, vector<64x256xbf16>, vector<8x256xf32> -> vector<8x256xf32>
    %89 = arith.addf %7, %88 : vector<8x256xf32>
    %90 = vector.extract_strided_slice %89 {offsets = [0, 0], sizes = [8, 192], strides = [1, 1]} : vector<8x256xf32> to vector<8x192xf32>
    %91 = arith.negf %90 : vector<8x192xf32>
    %92 = math.exp %91 : vector<8x192xf32>
    %cst_16 = arith.constant 1.000000e+00 : f32
    %93 = vector.broadcast %cst_16 : f32 to vector<8x192xf32>
    %94 = arith.addf %93, %92 : vector<8x192xf32>
    %95 = arith.divf %93, %94 : vector<8x192xf32>
    %96 = vector.extract_strided_slice %89 {offsets = [0, 192], sizes = [8, 64], strides = [1, 1]} : vector<8x256xf32> to vector<8x64xf32>
    %97 = math.tanh %96 : vector<8x64xf32>
    %98 = vector.extract_strided_slice %95 {offsets = [0, 64], sizes = [8, 64], strides = [1, 1]} : vector<8x192xf32> to vector<8x64xf32>
    %99 = arith.mulf %98, %83 : vector<8x64xf32>
    %100 = vector.extract_strided_slice %95 {offsets = [0, 0], sizes = [8, 64], strides = [1, 1]} : vector<8x192xf32> to vector<8x64xf32>
    %101 = arith.mulf %100, %97 : vector<8x64xf32>
    %102 = arith.addf %99, %101 : vector<8x64xf32>
    %103 = vector.extract_strided_slice %95 {offsets = [0, 128], sizes = [8, 64], strides = [1, 1]} : vector<8x192xf32> to vector<8x64xf32>
    %104 = math.tanh %102 : vector<8x64xf32>
    %105 = arith.mulf %103, %104 : vector<8x64xf32>
    %106 = vector.extract_strided_slice %105 {offsets = [0, 0], sizes = [8, 32], strides = [1, 1]} : vector<8x64xf32> to vector<8x32xf32>
    %107 = vector.extract_strided_slice %29 {offsets = [0, 32], sizes = [8, 32], strides = [1, 1]} : vector<8x64xf32> to vector<8x32xf32>
    %108 = vector.extract_strided_slice %105 {offsets = [0, 32], sizes = [8, 32], strides = [1, 1]} : vector<8x64xf32> to vector<8x32xf32>
    %109 = vector.extract_strided_slice %102 {offsets = [0, 32], sizes = [8, 32], strides = [1, 1]} : vector<8x64xf32> to vector<8x32xf32>
    %110 = vector.extract_strided_slice %29 {offsets = [0, 0], sizes = [8, 32], strides = [1, 1]} : vector<8x64xf32> to vector<8x32xf32>
    %111 = vector.extract_strided_slice %105 {offsets = [0, 32], sizes = [8, 32], strides = [1, 1]} : vector<8x64xf32> to vector<8x32xf32>
    %112 = vector.extract_strided_slice %105 {offsets = [0, 0], sizes = [8, 32], strides = [1, 1]} : vector<8x64xf32> to vector<8x32xf32>
    %113 = vector.extract_strided_slice %102 {offsets = [0, 0], sizes = [8, 32], strides = [1, 1]} : vector<8x64xf32> to vector<8x32xf32>
    %114 = tpu.concatenate %106, %107, %108, %109, %110, %111, %112, %113 in 1 : vector<8x32xf32>, vector<8x32xf32>, vector<8x32xf32>, vector<8x32xf32>, vector<8x32xf32>, vector<8x32xf32>, vector<8x32xf32>, vector<8x32xf32> -> vector<8x256xf32>
    %115 = arith.truncf %114 : vector<8x256xf32> to vector<8x256xbf16>
    %c0_17 = arith.constant 0 : index
    %c0_18 = arith.constant 0 : index
    %116 = vector.load %arg4[%c0_17, %c0_18] : memref<256x32xbf16, #tpu.memory_space<vmem>>, vector<256x32xbf16>
    %cst_19 = arith.constant dense<0.000000e+00> : vector<8x32xf32>
    %117 = tpu.matmul %115, %116, %cst_19 {dimension_numbers = #tpu.dot_dimension_numbers<[1], [0], [0], [1], [0, 0, 1, 1], [], []>} : vector<8x256xbf16>, vector<256x32xbf16>, vector<8x32xf32> -> vector<8x32xf32>
    %c0_20 = arith.constant 0 : index
    %c0_21 = arith.constant 0 : index
    %118 = vector.load %arg5[%c0_20, %c0_21] : memref<1x32xf32, #tpu.memory_space<vmem>>, vector<1x32xf32>
    %119 = vector.broadcast %118 : vector<1x32xf32> to vector<8x32xf32>
    %120 = arith.addf %117, %119 : vector<8x32xf32>
    %cst_22 = arith.constant 0.000000e+00 : f32
    %121 = vector.broadcast %cst_22 : f32 to vector<8x32xf32>
    %122 = arith.maximumf %120, %121 : vector<8x32xf32>
    %123 = arith.truncf %122 : vector<8x32xf32> to vector<8x32xbf16>
    %c0_23 = arith.constant 0 : index
    %c0_24 = arith.constant 0 : index
    %124 = vector.load %arg6[%c0_23, %c0_24] : memref<32x32xbf16, #tpu.memory_space<vmem>>, vector<32x32xbf16>
    %cst_25 = arith.constant dense<0.000000e+00> : vector<8x32xf32>
    %125 = tpu.matmul %123, %124, %cst_25 {dimension_numbers = #tpu.dot_dimension_numbers<[1], [0], [0], [1], [0, 0, 1, 1], [], []>} : vector<8x32xbf16>, vector<32x32xbf16>, vector<8x32xf32> -> vector<8x32xf32>
    %c0_26 = arith.constant 0 : index
    %c0_27 = arith.constant 0 : index
    %126 = vector.load %arg7[%c0_26, %c0_27] : memref<1x32xf32, #tpu.memory_space<vmem>>, vector<1x32xf32>
    %127 = vector.broadcast %126 : vector<1x32xf32> to vector<8x32xf32>
    %128 = arith.addf %125, %127 : vector<8x32xf32>
    %cst_28 = arith.constant 0.000000e+00 : f32
    %129 = vector.broadcast %cst_28 : f32 to vector<8x32xf32>
    %130 = arith.maximumf %128, %129 : vector<8x32xf32>
    %131 = arith.truncf %130 : vector<8x32xf32> to vector<8x32xbf16>
    %c0_29 = arith.constant 0 : index
    %c0_30 = arith.constant 0 : index
    %132 = vector.load %arg8[%c0_29, %c0_30] : memref<32x128xbf16, #tpu.memory_space<vmem>>, vector<32x128xbf16>
    %cst_31 = arith.constant dense<0.000000e+00> : vector<8x128xf32>
    %133 = tpu.matmul %131, %132, %cst_31 {dimension_numbers = #tpu.dot_dimension_numbers<[1], [0], [0], [1], [0, 0, 1, 1], [], []>} : vector<8x32xbf16>, vector<32x128xbf16>, vector<8x128xf32> -> vector<8x128xf32>
    %c0_32 = arith.constant 0 : index
    %c0_33 = arith.constant 0 : index
    %134 = vector.load %arg9[%c0_32, %c0_33] : memref<1x128xf32, #tpu.memory_space<vmem>>, vector<1x128xf32>
    %135 = vector.broadcast %134 : vector<1x128xf32> to vector<8x128xf32>
    %136 = arith.addf %133, %135 : vector<8x128xf32>
    %c0_34 = arith.constant 0 : index
    %c0_35 = arith.constant 0 : index
    %137 = vector.load %arg10[%c0_34, %c0_35] : memref<8x128xf32, #tpu.memory_space<vmem>>, vector<8x128xf32>
    tpu.vector_store %arg10[%c0_34, %c0_35], %136 {strides = array<i32>} : memref<8x128xf32, #tpu.memory_space<vmem>>, vector<8x128xf32>,
    return
  }
  func.func @transform_0(%arg0: i32) -> (i32, i32) {
    %c0_i32 = arith.constant 0 : i32
    %c0_i32_0 = arith.constant 0 : i32
    return %arg0, %c0_i32 : i32, i32
  }
  func.func @transform_1(%arg0: i32) -> (i32, i32) {
    %c0_i32 = arith.constant 0 : i32
    %c0_i32_0 = arith.constant 0 : i32
    %c0_i32_1 = arith.constant 0 : i32
    return %c0_i32, %c0_i32_0 : i32, i32
  }
  func.func @transform_2(%arg0: i32) -> (i32, i32) {
    %c0_i32 = arith.constant 0 : i32
    %c0_i32_0 = arith.constant 0 : i32
    %c0_i32_1 = arith.constant 0 : i32
    return %c0_i32, %c0_i32_0 : i32, i32
  }
  func.func @transform_3(%arg0: i32) -> (i32, i32) {
    %c0_i32 = arith.constant 0 : i32
    %c0_i32_0 = arith.constant 0 : i32
    %c0_i32_1 = arith.constant 0 : i32
    return %c0_i32, %c0_i32_0 : i32, i32
  }
  func.func @transform_4(%arg0: i32) -> (i32, i32) {
    %c0_i32 = arith.constant 0 : i32
    %c0_i32_0 = arith.constant 0 : i32
    %c0_i32_1 = arith.constant 0 : i32
    return %c0_i32, %c0_i32_0 : i32, i32
  }
  func.func @transform_5(%arg0: i32) -> (i32, i32) {
    %c0_i32 = arith.constant 0 : i32
    %c0_i32_0 = arith.constant 0 : i32
    %c0_i32_1 = arith.constant 0 : i32
    return %c0_i32, %c0_i32_0 : i32, i32
  }
  func.func @transform_6(%arg0: i32) -> (i32, i32) {
    %c0_i32 = arith.constant 0 : i32
    %c0_i32_0 = arith.constant 0 : i32
    %c0_i32_1 = arith.constant 0 : i32
    return %c0_i32, %c0_i32_0 : i32, i32
  }
  func.func @transform_7(%arg0: i32) -> (i32, i32) {
    %c0_i32 = arith.constant 0 : i32
    %c0_i32_0 = arith.constant 0 : i32
    %c0_i32_1 = arith.constant 0 : i32
    return %c0_i32, %c0_i32_0 : i32, i32
  }
  func.func @transform_8(%arg0: i32) -> (i32, i32) {
    %c0_i32 = arith.constant 0 : i32
    %c0_i32_0 = arith.constant 0 : i32
    %c0_i32_1 = arith.constant 0 : i32
    return %c0_i32, %c0_i32_0 : i32, i32
  }
  func.func @transform_9(%arg0: i32) -> (i32, i32) {
    %c0_i32 = arith.constant 0 : i32
    %c0_i32_0 = arith.constant 0 : i32
    return %arg0, %c0_i32 : i32, i32
  }
}

</mosaic_0001>

<llo_original>
// kernel: hits_lstm_forward.1
$region0: #{hits_lstm_forward.1}
  #allocation0 [shape = 'u32[]', space=smem, size = 0x4, offset = 0x4, fixed_abs, tag = 'smem constant byte address 0x4 - core index']
  #allocation1 [shape = 'u32[144,128]{1,0:T(1,128)}', space=vmem, size = 0x12000, scoped, tag = 'internal scratch']
  %s0 = inlined_call_operand.vmem [shape: bf16[16,29], index: 0, kind: input, shape index: {}]
  %s1 = inlined_call_operand.vmem [shape: bf16[29,1280], index: 1, kind: input, shape index: {}]
  %s2 = inlined_call_operand.hbm [shape: bf16[64,256], index: 2, kind: input, shape index: {}]
  %s3 = inlined_call_operand.vmem [shape: bf16[256,32], index: 3, kind: input, shape index: {}]
  %s4 = inlined_call_operand.vmem [shape: f32[1,32], index: 4, kind: input, shape index: {}]
  %s5 = inlined_call_operand.vmem [shape: bf16[32,32], index: 5, kind: input, shape index: {}]
  %s6 = inlined_call_operand.vmem [shape: f32[1,32], index: 6, kind: input, shape index: {}]
  %s7 = inlined_call_operand.vmem [shape: bf16[32,128], index: 7, kind: input, shape index: {}]
  %s8 = inlined_call_operand.vmem [shape: f32[1,128], index: 8, kind: input, shape index: {}]
  %s9 = inlined_call_operand.vmem [shape: f32[16,128], index: 9, kind: output, shape index: {}]
  %s10 = sld [smem:[#allocation0]]
  $region73: #{hits_lstm_forward.1} parent=0
    _
  %s12 = ssub.s32 1, %s10
  %s13 = scalar_select 0, %s12, %s10
  $region1: #{hits_lstm_forward.1} parent=0
    #allocation2 [shape = 'u8[32768]{0}', space=vmem, size = 0x8000, scoped, tag = 'input window, operand 2, single buffered']
    #allocation3 [shape = 's32[2]{0}', space=sflag, size = 0x8, scoped, tag = 'scoped memory for hits_lstm_forward.1']
    %14 = vsyncpa [#allocation3], 0
    loop: start=0, step=1, limit=4
    $region2: #{hits_lstm_forward.1} parent=1 // loop_pre_header
      _
    $region3: #{hits_lstm_forward.1} parent=1 // loop_header
      %s16 = sphi 0, %s20
      %p17 = scmp.ge.s32.totalorder %s16, 4
      %s26 = sphi 0, %s28
      %s29 = sphi 0, %s26
      %s30 = sphi 0, %s29
      %s46 = sphi 0, %s30
      %s50 = sphi 0, %s50
      %s52 = sphi 0, %s50
      %s53 = sphi 0, %s52
      %s67 = sphi 0, %s53
      %s71 = sphi 0, %s71
      %s73 = sphi 0, %s71
      %s74 = sphi 0, %s73
      %s88 = sphi 0, %s74
      %s92 = sphi 0, %s92
      %s94 = sphi 0, %s92
      %s95 = sphi 0, %s94
      %s109 = sphi 0, %s95
      %s113 = sphi 0, %s113
      %s115 = sphi 0, %s113
      %s116 = sphi 0, %s115
      %s130 = sphi 0, %s116
      %s134 = sphi 0, %s134
      %s136 = sphi 0, %s134
      %s137 = sphi 0, %s136
      %s151 = sphi 0, %s137
      %s155 = sphi 0, %s155
      %s157 = sphi 0, %s155
      %s158 = sphi 0, %s157
      %s172 = sphi 0, %s158
      %s176 = sphi 0, %s176
      %s178 = sphi 0, %s176
      %s179 = sphi 0, %s178
      %s193 = sphi 0, %s179
      %s197 = sphi 0, %s197
      %s199 = sphi 0, %s197
      %s200 = sphi 0, %s199
      %s214 = sphi 0, %s200
      %s220 = sphi 0, %s222
      %s223 = sphi 0, %s220
      %s224 = sphi 0, %s223
      %s240 = sphi 0, %s224
    $region4: #{hits_lstm_forward.1} parent=1 // loop_header_branch
      %19 = sbr.rel (%p17) target = $region8
    $region5: #{hits_lstm_forward.1} parent=1 // loop_body
      %s21 = ssub.s32 %s16, 1
      %s22 = ssub.s32 %s16, 2
      %s23 = sadd.s32 %s16, 1
      %s24 = ssub.s32 %s16, %s23
      %p25 = scmp.eq.s32.totalorder %s24, 0
      %s27 = sadd.s32 %s26, 1
      %s28 = scalar_select %p25, %s26, %s27
      %p31 = pneg %p25
      %p32 = scmp.eq.s32.totalorder %s16, 1
      %p33 = por %p31, %p32
      %p34 = scmp.ne.s32.totalorder %s26, %s29
      %p35 = scmp.eq.s32.totalorder %s16, 0
      %p36 = por %p34, %p35
      %p37 = scmp.ne.s32.totalorder %s26, %s29
      %p38 = scmp.eq.s32.totalorder %s21, 1
      %p39 = por %p37, %p38
      %p40 = scmp.ne.s32.totalorder %s29, %s30
      %p41 = scmp.eq.s32.totalorder %s21, 0
      %p42 = por %p40, %p41
      %p43 = scmp.ne.s32.totalorder %s29, %s30
      %p44 = scmp.eq.s32.totalorder %s22, 1
      %p45 = por %p43, %p44
      %p47 = scmp.ne.s32.totalorder %s30, %s46
      %p48 = scmp.eq.s32.totalorder %s22, 0
      %p49 = por %p47, %p48
      %s51 = sadd.s32 %s50, 1
      %p54 = scmp.eq.s32.totalorder %s16, 1
      %p55 = scmp.ne.s32.totalorder %s50, %s52
      %p56 = scmp.eq.s32.totalorder %s16, 0
      %p57 = por %p55, %p56
      %p58 = scmp.ne.s32.totalorder %s50, %s52
      %p59 = scmp.eq.s32.totalorder %s21, 1
      %p60 = por %p58, %p59
      %p61 = scmp.ne.s32.totalorder %s52, %s53
      %p62 = scmp.eq.s32.totalorder %s21, 0
      %p63 = por %p61, %p62
      %p64 = scmp.ne.s32.totalorder %s52, %s53
      %p65 = scmp.eq.s32.totalorder %s22, 1
      %p66 = por %p64, %p65
      %p68 = scmp.ne.s32.totalorder %s53, %s67
      %p69 = scmp.eq.s32.totalorder %s22, 0
      %p70 = por %p68, %p69
      %s72 = sadd.s32 %s71, 1
      %p75 = scmp.eq.s32.totalorder %s16, 1
      %p76 = scmp.ne.s32.totalorder %s71, %s73
      %p77 = scmp.eq.s32.totalorder %s16, 0
      %p78 = por %p76, %p77
      %p79 = scmp.ne.s32.totalorder %s71, %s73
      %p80 = scmp.eq.s32.totalorder %s21, 1
      %p81 = por %p79, %p80
      %p82 = scmp.ne.s32.totalorder %s73, %s74
      %p83 = scmp.eq.s32.totalorder %s21, 0
      %p84 = por %p82, %p83
      %p85 = scmp.ne.s32.totalorder %s73, %s74
      %p86 = scmp.eq.s32.totalorder %s22, 1
      %p87 = por %p85, %p86
      %p89 = scmp.ne.s32.totalorder %s74, %s88
      %p90 = scmp.eq.s32.totalorder %s22, 0
      %p91 = por %p89, %p90
      %s93 = sadd.s32 %s92, 1
      %p96 = scmp.eq.s32.totalorder %s16, 1
      %p97 = scmp.ne.s32.totalorder %s92, %s94
      %p98 = scmp.eq.s32.totalorder %s16, 0
      %p99 = por %p97, %p98
      %p100 = scmp.ne.s32.totalorder %s92, %s94
      %p101 = scmp.eq.s32.totalorder %s21, 1
      %p102 = por %p100, %p101
      %p103 = scmp.ne.s32.totalorder %s94, %s95
      %p104 = scmp.eq.s32.totalorder %s21, 0
      %p105 = por %p103, %p104
      %p106 = scmp.ne.s32.totalorder %s94, %s95
      %p107 = scmp.eq.s32.totalorder %s22, 1
      %p108 = por %p106, %p107
      %p110 = scmp.ne.s32.totalorder %s95, %s109
      %p111 = scmp.eq.s32.totalorder %s22, 0
      %p112 = por %p110, %p111
      %s114 = sadd.s32 %s113, 1
      %p117 = scmp.eq.s32.totalorder %s16, 1
      %p118 = scmp.ne.s32.totalorder %s113, %s115
      %p119 = scmp.eq.s32.totalorder %s16, 0
      %p120 = por %p118, %p119
      %p121 = scmp.ne.s32.totalorder %s113, %s115
      %p122 = scmp.eq.s32.totalorder %s21, 1
      %p123 = por %p121, %p122
      %p124 = scmp.ne.s32.totalorder %s115, %s116
      %p125 = scmp.eq.s32.totalorder %s21, 0
      %p126 = por %p124, %p125
      %p127 = scmp.ne.s32.totalorder %s115, %s116
      %p128 = scmp.eq.s32.totalorder %s22, 1
      %p129 = por %p127, %p128
      %p131 = scmp.ne.s32.totalorder %s116, %s130
      %p132 = scmp.eq.s32.totalorder %s22, 0
      %p133 = por %p131, %p132
      %s135 = sadd.s32 %s134, 1
      %p138 = scmp.eq.s32.totalorder %s16, 1
      %p139 = scmp.ne.s32.totalorder %s134, %s136
      %p140 = scmp.eq.s32.totalorder %s16, 0
      %p141 = por %p139, %p140
      %p142 = scmp.ne.s32.totalorder %s134, %s136
      %p143 = scmp.eq.s32.totalorder %s21, 1
      %p144 = por %p142, %p143
      %p145 = scmp.ne.s32.totalorder %s136, %s137
      %p146 = scmp.eq.s32.totalorder %s21, 0
      %p147 = por %p145, %p146
      %p148 = scmp.ne.s32.totalorder %s136, %s137
      %p149 = scmp.eq.s32.totalorder %s22, 1
      %p150 = por %p148, %p149
      %p152 = scmp.ne.s32.totalorder %s137, %s151
      %p153 = scmp.eq.s32.totalorder %s22, 0
      %p154 = por %p152, %p153
      %s156 = sadd.s32 %s155, 1
      %p159 = scmp.eq.s32.totalorder %s16, 1
      %p160 = scmp.ne.s32.totalorder %s155, %s157
      %p161 = scmp.eq.s32.totalorder %s16, 0
      %p162 = por %p160, %p161
      %p163 = scmp.ne.s32.totalorder %s155, %s157
      %p164 = scmp.eq.s32.totalorder %s21, 1
      %p165 = por %p163, %p164
      %p166 = scmp.ne.s32.totalorder %s157, %s158
      %p167 = scmp.eq.s32.totalorder %s21, 0
      %p168 = por %p166, %p167
      %p169 = scmp.ne.s32.totalorder %s157, %s158
      %p170 = scmp.eq.s32.totalorder %s22, 1
      %p171 = por %p169, %p170
      %p173 = scmp.ne.s32.totalorder %s158, %s172
      %p174 = scmp.eq.s32.totalorder %s22, 0
      %p175 = por %p173, %p174
      %s177 = sadd.s32 %s176, 1
      %p180 = scmp.eq.s32.totalorder %s16, 1
      %p181 = scmp.ne.s32.totalorder %s176, %s178
      %p182 = scmp.eq.s32.totalorder %s16, 0
      %p183 = por %p181, %p182
      %p184 = scmp.ne.s32.totalorder %s176, %s178
      %p185 = scmp.eq.s32.totalorder %s21, 1
      %p186 = por %p184, %p185
      %p187 = scmp.ne.s32.totalorder %s178, %s179
      %p188 = scmp.eq.s32.totalorder %s21, 0
      %p189 = por %p187, %p188
      %p190 = scmp.ne.s32.totalorder %s178, %s179
      %p191 = scmp.eq.s32.totalorder %s22, 1
      %p192 = por %p190, %p191
      %p194 = scmp.ne.s32.totalorder %s179, %s193
      %p195 = scmp.eq.s32.totalorder %s22, 0
      %p196 = por %p194, %p195
      %s198 = sadd.s32 %s197, 1
      %p201 = scmp.eq.s32.totalorder %s16, 1
      %p202 = scmp.ne.s32.totalorder %s197, %s199
      %p203 = scmp.eq.s32.totalorder %s16, 0
      %p204 = por %p202, %p203
      %p205 = scmp.ne.s32.totalorder %s197, %s199
      %p206 = scmp.eq.s32.totalorder %s21, 1
      %p207 = por %p205, %p206
      %p208 = scmp.ne.s32.totalorder %s199, %s200
      %p209 = scmp.eq.s32.totalorder %s21, 0
      %p210 = por %p208, %p209
      %p211 = scmp.ne.s32.totalorder %s199, %s200
      %p212 = scmp.eq.s32.totalorder %s22, 1
      %p213 = por %p211, %p212
      %p215 = scmp.ne.s32.totalorder %s200, %s214
      %p216 = scmp.eq.s32.totalorder %s22, 0
      %p217 = por %p215, %p216
      %s218 = ssub.s32 %s16, %s23
      %p219 = scmp.eq.s32.totalorder %s218, 0
      %s221 = sadd.s32 %s220, 1
      %s222 = scalar_select %p219, %s220, %s221
      %p225 = pneg %p219
      %p226 = scmp.eq.s32.totalorder %s16, 1
      %p227 = por %p225, %p226
      %p228 = scmp.ne.s32.totalorder %s220, %s223
      %p229 = scmp.eq.s32.totalorder %s16, 0
      %p230 = por %p228, %p229
      %p231 = scmp.ne.s32.totalorder %s220, %s223
      %p232 = scmp.eq.s32.totalorder %s21, 1
      %p233 = por %p231, %p232
      %p234 = scmp.ne.s32.totalorder %s223, %s224
      %p235 = scmp.eq.s32.totalorder %s21, 0
      %p236 = por %p234, %p235
      %p237 = scmp.ne.s32.totalorder %s223, %s224
      %p238 = scmp.eq.s32.totalorder %s22, 1
      %p239 = por %p237, %p238
      %p241 = scmp.ne.s32.totalorder %s224, %s240
      %p242 = scmp.eq.s32.totalorder %s22, 0
      %p243 = por %p241, %p242
      %p244 = scmp.le.s32.totalorder 1, %s16
      %p245 = scmp.lt.s32.totalorder %s16, 3
      %p246 = pnand %p244, %p245
      %p247 = pneg %p246
      // Predicated region
      $region9: #{hits_lstm_forward.1} parent=5 // pred_check
        _
      $region10: #{hits_lstm_forward.1} parent=5 // pred_check_branch
        %249 = sbr.rel (%p246) target = $region12
      $region11: #{hits_lstm_forward.1} parent=5 // pred_region
        %s250 = ssub.s32 %s16, 1
        // Predicated region
        $region13: #{hits_lstm_forward.1} parent=11 // pred_check
          %p251 = pneg %p63
        $region14: #{hits_lstm_forward.1} parent=11 // pred_check_branch
          %253 = sbr.rel (%p251) target = $region16
        $region15: #{hits_lstm_forward.1} parent=11 // pred_region
          _
        $region16: #{hits_lstm_forward.1} parent=11 // pred_fallthru
          _
        // Predicated region
        $region17: #{hits_lstm_forward.1} parent=11 // pred_check
          %p254 = pneg %p84
        $region18: #{hits_lstm_forward.1} parent=11 // pred_check_branch
          %256 = sbr.rel (%p254) target = $region20
        $region19: #{hits_lstm_forward.1} parent=11 // pred_region
          %s258 = ssub.s32 1024, 1024
          %259 = vsyncadd [#allocation3], %s258
          %s260 = sshll.u32 [#allocation2], 4
          %s261 = int_to_ptr.vmem [resolvable:$true] %s260
          %266 = dma.hbm_to_vmem [thread:$0]  %s2, 1024, %s261, [#allocation3], 128, 128, 8
        $region20: #{hits_lstm_forward.1} parent=11 // pred_fallthru
          _
        // Predicated region
        $region21: #{hits_lstm_forward.1} parent=11 // pred_check
          %p267 = pneg %p105
        $region22: #{hits_lstm_forward.1} parent=11 // pred_check_branch
          %269 = sbr.rel (%p267) target = $region24
        $region23: #{hits_lstm_forward.1} parent=11 // pred_region
          _
        $region24: #{hits_lstm_forward.1} parent=11 // pred_fallthru
          _
        // Predicated region
        $region25: #{hits_lstm_forward.1} parent=11 // pred_check
          %p270 = pneg %p126
        $region26: #{hits_lstm_forward.1} parent=11 // pred_check_branch
          %272 = sbr.rel (%p270) target = $region28
        $region27: #{hits_lstm_forward.1} parent=11 // pred_region
          _
        $region28: #{hits_lstm_forward.1} parent=11 // pred_fallthru
          _
        // Predicated region
        $region29: #{hits_lstm_forward.1} parent=11 // pred_check
          %p273 = pneg %p147
        $region30: #{hits_lstm_forward.1} parent=11 // pred_check_branch
          %275 = sbr.rel (%p273) target = $region32
        $region31: #{hits_lstm_forward.1} parent=11 // pred_region
          _
        $region32: #{hits_lstm_forward.1} parent=11 // pred_fallthru
          _
        // Predicated region
        $region33: #{hits_lstm_forward.1} parent=11 // pred_check
          %p276 = pneg %p168
        $region34: #{hits_lstm_forward.1} parent=11 // pred_check_branch
          %278 = sbr.rel (%p276) target = $region36
        $region35: #{hits_lstm_forward.1} parent=11 // pred_region
          _
        $region36: #{hits_lstm_forward.1} parent=11 // pred_fallthru
          _
        // Predicated region
        $region37: #{hits_lstm_forward.1} parent=11 // pred_check
          %p279 = pneg %p189
        $region38: #{hits_lstm_forward.1} parent=11 // pred_check_branch
          %281 = sbr.rel (%p279) target = $region40
        $region39: #{hits_lstm_forward.1} parent=11 // pred_region
          _
        $region40: #{hits_lstm_forward.1} parent=11 // pred_fallthru
          _
        // Predicated region
        $region41: #{hits_lstm_forward.1} parent=11 // pred_check
          %p282 = pneg %p210
        $region42: #{hits_lstm_forward.1} parent=11 // pred_check_branch
          %284 = sbr.rel (%p282) target = $region44
        $region43: #{hits_lstm_forward.1} parent=11 // pred_region
          _
        $region44: #{hits_lstm_forward.1} parent=11 // pred_fallthru
          _
      $region12: #{hits_lstm_forward.1} parent=5 // pred_fallthru
        _
      %p285 = scmp.lt.s32.totalorder %s16, 2
      // Predicated region
      $region45: #{hits_lstm_forward.1} parent=5 // pred_check
        %p286 = pneg %p285
      $region46: #{hits_lstm_forward.1} parent=5 // pred_check_branch
        %288 = sbr.rel (%p286) target = $region48
      $region47: #{hits_lstm_forward.1} parent=5 // pred_region
        // Predicated region
        $region49: #{hits_lstm_forward.1} parent=47 // pred_check
          %p289 = pneg %p36
        $region50: #{hits_lstm_forward.1} parent=47 // pred_check_branch
          %291 = sbr.rel (%p289) target = $region52
        $region51: #{hits_lstm_forward.1} parent=47 // pred_region
          %p292 = scmp.lt.s32.totalorder %s16, 1
          %s293 = scalar_select %p292, %s16, 1
          %s294 = smul.addr %s293, 4
          %s295 = scalar_lea.vmem %s0, %s294
        $region52: #{hits_lstm_forward.1} parent=47 // pred_fallthru
          _
      $region48: #{hits_lstm_forward.1} parent=5 // pred_fallthru
        _
      %p296 = scmp.le.s32.totalorder 1, %s16
      %p297 = scmp.lt.s32.totalorder %s16, 3
      %p298 = pnand %p296, %p297
      %p299 = pneg %p298
      // Predicated region
      $region53: #{hits_lstm_forward.1} parent=5 // pred_check
        _
      $region54: #{hits_lstm_forward.1} parent=5 // pred_check_branch
        %301 = sbr.rel (%p298) target = $region56
      $region55: #{hits_lstm_forward.1} parent=5 // pred_region
        %s302 = ssub.s32 %s16, 1
        // Predicated region
        $region57: #{hits_lstm_forward.1} parent=55 // pred_check
          %p303 = pneg %p84
        $region58: #{hits_lstm_forward.1} parent=55 // pred_check_branch
          %305 = sbr.rel (%p303) target = $region60
        $region59: #{hits_lstm_forward.1} parent=55 // pred_region
          %306 = dma.done [#allocation3], 1024
        $region60: #{hits_lstm_forward.1} parent=55 // pred_fallthru
          _
        %p307 = scmp.lt.s32.totalorder %s21, 1
        %s308 = scalar_select %p307, %s21, 1
        %s309 = smul.addr %s308, 4
        %s310 = scalar_lea.vmem %s0, %s309
        %p311 = pneg %p42
        %p312 = pneg %p39
        %p313 = pneg %p63
        %p314 = pneg %p60
        %p315 = pneg %p84
        %p316 = pneg %p81
        %p317 = pneg %p105
        %p318 = pneg %p102
        %p319 = pneg %p126
        %p320 = pneg %p123
        %p321 = pneg %p147
        %p322 = pneg %p144
        %p323 = pneg %p168
        %p324 = pneg %p165
        %p325 = pneg %p189
        %p326 = pneg %p186
        %p327 = pneg %p210
        %p328 = pneg %p207
        %p329 = pneg %p236
        %p330 = pneg %p233
        %p331 = scmp.lt.s32.totalorder %s21, 1
        %s332 = scalar_select %p331, %s21, 1
        %s333 = smul.addr %s332, 8
        %s334 = scalar_lea.vmem %s9, %s333
        %p335 = scmp.lt.s32.totalorder %s21, 1
        %s336 = scalar_select %p335, %s21, 1
        %s337 = smul.addr %s336, 4
        %s338 = scalar_lea.vmem %s0, %s337
        %p339 = scmp.lt.s32.totalorder %s21, 1
        %s340 = scalar_select %p339, %s21, 1
        %s341 = smul.addr %s340, 8
        %s342 = scalar_lea.vmem %s9, %s341
        %v344 = vld [vmem:[%s338] sm:$0xf]
        %v345 = vld [vmem:[%s1] sm:$0xff]
        %v346 = vld [vmem:[%s1 + $0x8] sm:$0xff]
        %v347 = vld [vmem:[%s1 + $0x10] sm:$0xff]
        %v348 = vld [vmem:[%s1 + $0x18] sm:$0xff]
        %v349 = vld [vmem:[%s1 + $0x20] sm:$0xff]
        %v350 = vld [vmem:[%s1 + $0x28] sm:$0xff]
        %v351 = vld [vmem:[%s1 + $0x30] sm:$0xff]
        %v352 = vld [vmem:[%s1 + $0x38] sm:$0xff]
        %v353 = vld [vmem:[%s1 + $0x40] sm:$0xff]
        %v354 = vld [vmem:[%s1 + $0x48] sm:$0xff]
        %v355 = vld [vmem:[%s1 + $0x50] sm:$0xff]
        %v356 = vld [vmem:[%s1 + $0x58] sm:$0xff]
        %v357 = vld [vmem:[%s1 + $0x60] sm:$0xff]
        %v358 = vld [vmem:[%s1 + $0x68] sm:$0xff]
        %v359 = vld [vmem:[%s1 + $0x70] sm:$0xff]
        %v360 = vld [vmem:[%s1 + $0x78] sm:$0x77]
        %v361 = vld [vmem:[%s1 + $0x80] sm:$0x77]
        %v362 = vld [vmem:[%s1 + $0x88] sm:$0x77]
        %v363 = vld [vmem:[%s1 + $0x90] sm:$0x77]
        %v364 = vld [vmem:[%s1 + $0x98] sm:$0x77]
        %v385 = vunpack.c.l.b16 %v345
        %v386 = vunpack.c.h.b16 %v345
        %v387 = vunpack.c.l.b16 %v346
        %v388 = vunpack.c.h.b16 %v346
        %v389 = vunpack.c.l.b16 %v347
        %v390 = vunpack.c.h.b16 %v347
        %v391 = vunpack.c.l.b16 %v348
        %v392 = vunpack.c.h.b16 %v348
        %v393 = vunpack.c.l.b16 %v349
        %v394 = vunpack.c.h.b16 %v349
        %v395 = vunpack.c.l.b16 %v350
        %v396 = vunpack.c.h.b16 %v350
        %v397 = vunpack.c.l.b16 %v351
        %v398 = vunpack.c.h.b16 %v351
        %v399 = vunpack.c.l.b16 %v352
        %v400 = vunpack.c.h.b16 %v352
        %v401 = vunpack.c.l.b16 %v353
        %v402 = vunpack.c.h.b16 %v353
        %v403 = vunpack.c.l.b16 %v354
        %v404 = vunpack.c.h.b16 %v354
        %v405 = vunpack.c.l.b16 %v355
        %v406 = vunpack.c.h.b16 %v355
        %v407 = vunpack.c.l.b16 %v356
        %v408 = vunpack.c.h.b16 %v356
        %v409 = vunpack.c.l.b16 %v357
        %v410 = vunpack.c.h.b16 %v357
        %v411 = vunpack.c.l.b16 %v358
        %v412 = vunpack.c.h.b16 %v358
        %v413 = vunpack.c.l.b16 %v359
        %v414 = vunpack.c.h.b16 %v359
        %v415 = vunpack.c.l.b16 %v360
        %v416 = vunpack.c.h.b16 %v360
        %v417 = vunpack.c.l.b16 %v361
        %v418 = vunpack.c.h.b16 %v361
        %v419 = vunpack.c.l.b16 %v362
        %v420 = vunpack.c.h.b16 %v362
        %v421 = vunpack.c.l.b16 %v363
        %v422 = vunpack.c.h.b16 %v363
        %v423 = vunpack.c.l.b16 %v364
        %v424 = vunpack.c.h.b16 %v364
        %v425 = vpack.c.b16 %v395, %v385
        %v426 = vpack.c.b16 %v396, %v386
        %v427 = vpack.c.b16 %v397, %v387
        %v428 = vpack.c.b16 %v398, %v388
        %v429 = vpack.c.b16 %v399, %v389
        %v430 = vpack.c.b16 %v400, %v390
        %v431 = vpack.c.b16 %v401, %v391
        %v432 = vpack.c.b16 %v402, %v392
        %v433 = vpack.c.b16 %v403, %v393
        %v434 = vpack.c.b16 %v404, %v394
        %v435 = vpack.c.b16 %v415, %v405
        %v436 = vpack.c.b16 %v416, %v406
        %v437 = vpack.c.b16 %v417, %v407
        %v438 = vpack.c.b16 %v418, %v408
        %v439 = vpack.c.b16 %v419, %v409
        %v440 = vpack.c.b16 %v420, %v410
        %v441 = vpack.c.b16 %v421, %v411
        %v442 = vpack.c.b16 %v422, %v412
        %v443 = vpack.c.b16 %v423, %v413
        %v444 = vpack.c.b16 %v424, %v414
        %vm455 = vcmask 236544
        %v457 = vsel %vm455, %v344, 0
        %vm459 = vcmask 1045504
        %vm460 = vcmask 1046528
        %v461 = vsel %vm459, 4294967295, 65535
        %v462 = vsel %vm460, %v461, 0
        %v464 = vand.u32 %v435, %v462
        %v467 = vand.u32 %v436, %v462
        %v470 = vand.u32 %v437, %v462
        %v473 = vand.u32 %v438, %v462
        %v476 = vand.u32 %v439, %v462
        %v479 = vand.u32 %v440, %v462
        %v482 = vand.u32 %v441, %v462
        %v485 = vand.u32 %v442, %v462
        %v488 = vand.u32 %v443, %v462
        %v491 = vand.u32 %v444, %v462
        %493 = vmatprep.subr.bf16.mxu0 %v426
        %494 = vmatpush1.bf16.msra.mxu0 %v425
        %495 = vmatprep.subr.bf16.mxu0 %v467
        %496 = vmatpush1.bf16.msra.mxu0 %v464
        %497 = vmatprep.subr.bf16.mxu0 0
        %498 = vmatpush1.bf16.msra.mxu0 0
        %499 = vmatprep.subr.bf16.mxu0 0
        %500 = vmatpush1.bf16.msra.mxu0 0
        %501 = vmatprep.subr.bf16.mxu0 0
        %502 = vmatpush1.bf16.msra.mxu0 0
        %503 = vmatprep.subr.bf16.mxu0 0
        %504 = vmatpush1.bf16.msra.mxu0 0
        %505 = vmatprep.subr.bf16.mxu0 0
        %506 = vmatpush1.bf16.msra.mxu0 0
        %507 = vmatprep.subr.bf16.mxu0 0
        %508 = vmatpush1.bf16.msra.mxu0 0
        %509 = vmatprep.subr.bf16.mxu0 0
        %510 = vmatpush1.bf16.msra.mxu0 0
        %511 = vmatprep.subr.bf16.mxu0 0
        %512 = vmatpush1.bf16.msra.mxu0 0
        %513 = vmatprep.subr.bf16.mxu0 0
        %514 = vmatpush1.bf16.msra.mxu0 0
        %515 = vmatprep.subr.bf16.mxu0 0
        %516 = vmatpush1.bf16.msra.mxu0 0
        %517 = vmatprep.subr.bf16.mxu0 0
        %518 = vmatpush1.bf16.msra.mxu0 0
        %519 = vmatprep.subr.bf16.mxu0 0
        %520 = vmatpush1.bf16.msra.mxu0 0
        %521 = vmatprep.subr.bf16.mxu0 0
        %522 = vmatpush1.bf16.msra.mxu0 0
        %523 = vmatprep.subr.bf16.mxu0 0
        %524 = vmatpush1.bf16.msra.mxu0 0
        %525 = vmatprep.mubr.bf16.mxu0 0
        %526 = vmatmul.mubr.bf16.gmra.mrb[0].mxu0 %v457
        %v527 = vpop.f32.mrb[0].mxu0
        %v528 = vadd.f32 0.0, %v527
        %v529 = vpop.f32.mrb[0].mxu0
        %v530 = vadd.f32 0.0, %v529
        %v531 = vpop.f32.mrb[0].mxu0
        %v532 = vpop.f32.mrb[0].mxu0
        %533 = vdwg.mxu0
        %534 = vmatprep.subr.bf16.mxu0 %v428
        %535 = vmatpush1.bf16.msra.mxu0 %v427
        %536 = vmatprep.subr.bf16.mxu0 %v473
        %537 = vmatpush1.bf16.msra.mxu0 %v470
        %538 = vmatprep.subr.bf16.mxu0 0
        %539 = vmatpush1.bf16.msra.mxu0 0
        %540 = vmatprep.subr.bf16.mxu0 0
        %541 = vmatpush1.bf16.msra.mxu0 0
        %542 = vmatprep.subr.bf16.mxu0 0
        %543 = vmatpush1.bf16.msra.mxu0 0
        %544 = vmatprep.subr.bf16.mxu0 0
        %545 = vmatpush1.bf16.msra.mxu0 0
        %546 = vmatprep.subr.bf16.mxu0 0
        %547 = vmatpush1.bf16.msra.mxu0 0
        %548 = vmatprep.subr.bf16.mxu0 0
        %549 = vmatpush1.bf16.msra.mxu0 0
        %550 = vmatprep.subr.bf16.mxu0 0
        %551 = vmatpush1.bf16.msra.mxu0 0
        %552 = vmatprep.subr.bf16.mxu0 0
        %553 = vmatpush1.bf16.msra.mxu0 0
        %554 = vmatprep.subr.bf16.mxu0 0
        %555 = vmatpush1.bf16.msra.mxu0 0
        %556 = vmatprep.subr.bf16.mxu0 0
        %557 = vmatpush1.bf16.msra.mxu0 0
        %558 = vmatprep.subr.bf16.mxu0 0
        %559 = vmatpush1.bf16.msra.mxu0 0
        %560 = vmatprep.subr.bf16.mxu0 0
        %561 = vmatpush1.bf16.msra.mxu0 0
        %562 = vmatprep.subr.bf16.mxu0 0
        %563 = vmatpush1.bf16.msra.mxu0 0
        %564 = vmatprep.subr.bf16.mxu0 0
        %565 = vmatpush1.bf16.msra.mxu0 0
        %566 = vmatprep.mubr.bf16.mxu0 0
        %567 = vmatmul.mubr.bf16.gmra.mrb[0].mxu0 %v457
        %v568 = vpop.f32.mrb[0].mxu0
        %v569 = vadd.f32 0.0, %v568
        %v570 = vpop.f32.mrb[0].mxu0
        %v571 = vadd.f32 0.0, %v570
        %v572 = vpop.f32.mrb[0].mxu0
        %v573 = vpop.f32.mrb[0].mxu0
        %574 = vdwg.mxu0
        %575 = vmatprep.subr.bf16.mxu0 %v430
        %576 = vmatpush1.bf16.msra.mxu0 %v429
        %577 = vmatprep.subr.bf16.mxu0 %v479
        %578 = vmatpush1.bf16.msra.mxu0 %v476
        %579 = vmatprep.subr.bf16.mxu0 0
        %580 = vmatpush1.bf16.msra.mxu0 0
        %581 = vmatprep.subr.bf16.mxu0 0
        %582 = vmatpush1.bf16.msra.mxu0 0
        %583 = vmatprep.subr.bf16.mxu0 0
        %584 = vmatpush1.bf16.msra.mxu0 0
        %585 = vmatprep.subr.bf16.mxu0 0
        %586 = vmatpush1.bf16.msra.mxu0 0
        %587 = vmatprep.subr.bf16.mxu0 0
        %588 = vmatpush1.bf16.msra.mxu0 0
        %589 = vmatprep.subr.bf16.mxu0 0
        %590 = vmatpush1.bf16.msra.mxu0 0
        %591 = vmatprep.subr.bf16.mxu0 0
        %592 = vmatpush1.bf16.msra.mxu0 0
        %593 = vmatprep.subr.bf16.mxu0 0
        %594 = vmatpush1.bf16.msra.mxu0 0
        %595 = vmatprep.subr.bf16.mxu0 0
        %596 = vmatpush1.bf16.msra.mxu0 0
        %597 = vmatprep.subr.bf16.mxu0 0
        %598 = vmatpush1.bf16.msra.mxu0 0
        %599 = vmatprep.subr.bf16.mxu0 0
        %600 = vmatpush1.bf16.msra.mxu0 0
        %601 = vmatprep.subr.bf16.mxu0 0
        %602 = vmatpush1.bf16.msra.mxu0 0
        %603 = vmatprep.subr.bf16.mxu0 0
        %604 = vmatpush1.bf16.msra.mxu0 0
        %605 = vmatprep.subr.bf16.mxu0 0
        %606 = vmatpush1.bf16.msra.mxu0 0
        %607 = vmatprep.mubr.bf16.mxu0 0
        %608 = vmatmul.mubr.bf16.gmra.mrb[0].mxu0 %v457
        %v609 = vpop.f32.mrb[0].mxu0
        %v610 = vadd.f32 0.0, %v609
        %v611 = vpop.f32.mrb[0].mxu0
        %v612 = vadd.f32 0.0, %v611
        %v613 = vpop.f32.mrb[0].mxu0
        %v614 = vpop.f32.mrb[0].mxu0
        %615 = vdwg.mxu0
        %616 = vmatprep.subr.bf16.mxu0 %v432
        %617 = vmatpush1.bf16.msra.mxu0 %v431
        %618 = vmatprep.subr.bf16.mxu0 %v485
        %619 = vmatpush1.bf16.msra.mxu0 %v482
        %620 = vmatprep.subr.bf16.mxu0 0
        %621 = vmatpush1.bf16.msra.mxu0 0
        %622 = vmatprep.subr.bf16.mxu0 0
        %623 = vmatpush1.bf16.msra.mxu0 0
        %624 = vmatprep.subr.bf16.mxu0 0
        %625 = vmatpush1.bf16.msra.mxu0 0
        %626 = vmatprep.subr.bf16.mxu0 0
        %627 = vmatpush1.bf16.msra.mxu0 0
        %628 = vmatprep.subr.bf16.mxu0 0
        %629 = vmatpush1.bf16.msra.mxu0 0
        %630 = vmatprep.subr.bf16.mxu0 0
        %631 = vmatpush1.bf16.msra.mxu0 0
        %632 = vmatprep.subr.bf16.mxu0 0
        %633 = vmatpush1.bf16.msra.mxu0 0
        %634 = vmatprep.subr.bf16.mxu0 0
        %635 = vmatpush1.bf16.msra.mxu0 0
        %636 = vmatprep.subr.bf16.mxu0 0
        %637 = vmatpush1.bf16.msra.mxu0 0
        %638 = vmatprep.subr.bf16.mxu0 0
        %639 = vmatpush1.bf16.msra.mxu0 0
        %640 = vmatprep.subr.bf16.mxu0 0
        %641 = vmatpush1.bf16.msra.mxu0 0
        %642 = vmatprep.subr.bf16.mxu0 0
        %643 = vmatpush1.bf16.msra.mxu0 0
        %644 = vmatprep.subr.bf16.mxu0 0
        %645 = vmatpush1.bf16.msra.mxu0 0
        %646 = vmatprep.subr.bf16.mxu0 0
        %647 = vmatpush1.bf16.msra.mxu0 0
        %648 = vmatprep.mubr.bf16.mxu0 0
        %649 = vmatmul.mubr.bf16.gmra.mrb[0].mxu0 %v457
        %v650 = vpop.f32.mrb[0].mxu0
        %v651 = vadd.f32 0.0, %v650
        %v652 = vpop.f32.mrb[0].mxu0
        %v653 = vadd.f32 0.0, %v652
        %v654 = vpop.f32.mrb[0].mxu0
        %v655 = vpop.f32.mrb[0].mxu0
        %656 = vdwg.mxu0
        %657 = vmatprep.subr.bf16.mxu0 %v434
        %658 = vmatpush1.bf16.msra.mxu0 %v433
        %659 = vmatprep.subr.bf16.mxu0 %v491
        %660 = vmatpush1.bf16.msra.mxu0 %v488
        %661 = vmatprep.subr.bf16.mxu0 0
        %662 = vmatpush1.bf16.msra.mxu0 0
        %663 = vmatprep.subr.bf16.mxu0 0
        %664 = vmatpush1.bf16.msra.mxu0 0
        %665 = vmatprep.subr.bf16.mxu0 0
        %666 = vmatpush1.bf16.msra.mxu0 0
        %667 = vmatprep.subr.bf16.mxu0 0
        %668 = vmatpush1.bf16.msra.mxu0 0
        %669 = vmatprep.subr.bf16.mxu0 0
        %670 = vmatpush1.bf16.msra.mxu0 0
        %671 = vmatprep.subr.bf16.mxu0 0
        %672 = vmatpush1.bf16.msra.mxu0 0
        %673 = vmatprep.subr.bf16.mxu0 0
        %674 = vmatpush1.bf16.msra.mxu0 0
        %675 = vmatprep.subr.bf16.mxu0 0
        %676 = vmatpush1.bf16.msra.mxu0 0
        %677 = vmatprep.subr.bf16.mxu0 0
        %678 = vmatpush1.bf16.msra.mxu0 0
        %679 = vmatprep.subr.bf16.mxu0 0
        %680 = vmatpush1.bf16.msra.mxu0 0
        %681 = vmatprep.subr.bf16.mxu0 0
        %682 = vmatpush1.bf16.msra.mxu0 0
        %683 = vmatprep.subr.bf16.mxu0 0
        %684 = vmatpush1.bf16.msra.mxu0 0
        %685 = vmatprep.subr.bf16.mxu0 0
        %686 = vmatpush1.bf16.msra.mxu0 0
        %687 = vmatprep.subr.bf16.mxu0 0
        %688 = vmatpush1.bf16.msra.mxu0 0
        %689 = vmatprep.mubr.bf16.mxu0 0
        %690 = vmatmul.mubr.bf16.gmra.mrb[0].mxu0 %v457
        %v691 = vpop.f32.mrb[0].mxu0
        %v692 = vadd.f32 0.0, %v691
        %v693 = vpop.f32.mrb[0].mxu0
        %v694 = vadd.f32 0.0, %v693
        %v695 = vpop.f32.mrb[0].mxu0
        %v696 = vpop.f32.mrb[0].mxu0
        %697 = vdwg.mxu0
        %v698 = vld [vmem:[#allocation2] sm:$0xff]
        %v699 = vld [vmem:[#allocation2 + $0x8] sm:$0xff]
        %v700 = vld [vmem:[#allocation2 + $0x10] sm:$0xff]
        %v701 = vld [vmem:[#allocation2 + $0x18] sm:$0xff]
        %v702 = vld [vmem:[#allocation2 + $0x20] sm:$0xff]
        %v703 = vld [vmem:[#allocation2 + $0x28] sm:$0xff]
        %v704 = vld [vmem:[#allocation2 + $0x30] sm:$0xff]
        %v705 = vld [vmem:[#allocation2 + $0x38] sm:$0xff]
        %v714 = vunpack.c.l.b16 %v698
        %v715 = vunpack.c.h.b16 %v698
        %v716 = vunpack.c.l.b16 %v699
        %v717 = vunpack.c.h.b16 %v699
        %v718 = vunpack.c.l.b16 %v700
        %v719 = vunpack.c.h.b16 %v700
        %v720 = vunpack.c.l.b16 %v701
        %v721 = vunpack.c.h.b16 %v701
        %v722 = vunpack.c.l.b16 %v702
        %v723 = vunpack.c.h.b16 %v702
        %v724 = vunpack.c.l.b16 %v703
        %v725 = vunpack.c.h.b16 %v703
        %v726 = vunpack.c.l.b16 %v704
        %v727 = vunpack.c.h.b16 %v704
        %v728 = vunpack.c.l.b16 %v705
        %v729 = vunpack.c.h.b16 %v705
        %v730 = vpack.c.b16 %v716, %v714
        %v731 = vpack.c.b16 %v717, %v715
        %v732 = vpack.c.b16 %v720, %v718
        %v733 = vpack.c.b16 %v721, %v719
        %v734 = vpack.c.b16 %v724, %v722
        %v735 = vpack.c.b16 %v725, %v723
        %v736 = vpack.c.b16 %v728, %v726
        %v737 = vpack.c.b16 %v729, %v727
        %vm746 = vcmask 523264
        %v748 = vsel %vm746, 0, 0
        %750 = vmatprep.subr.bf16.mxu0 %v731
        %751 = vmatpush1.bf16.msra.mxu0 %v730
        %752 = vmatprep.subr.bf16.mxu0 %v733
        %753 = vmatpush1.bf16.msra.mxu0 %v732
        %754 = vmatprep.subr.bf16.mxu0 %v735
        %755 = vmatpush1.bf16.msra.mxu0 %v734
        %756 = vmatprep.subr.bf16.mxu0 %v737
        %757 = vmatpush1.bf16.msra.mxu0 %v736
        %758 = vmatprep.subr.bf16.mxu0 0
        %759 = vmatpush1.bf16.msra.mxu0 0
        %760 = vmatprep.subr.bf16.mxu0 0
        %761 = vmatpush1.bf16.msra.mxu0 0
        %762 = vmatprep.subr.bf16.mxu0 0
        %763 = vmatpush1.bf16.msra.mxu0 0
        %764 = vmatprep.subr.bf16.mxu0 0
        %765 = vmatpush1.bf16.msra.mxu0 0
        %766 = vmatprep.subr.bf16.mxu0 0
        %767 = vmatpush1.bf16.msra.mxu0 0
        %768 = vmatprep.subr.bf16.mxu0 0
        %769 = vmatpush1.bf16.msra.mxu0 0
        %770 = vmatprep.subr.bf16.mxu0 0
        %771 = vmatpush1.bf16.msra.mxu0 0
        %772 = vmatprep.subr.bf16.mxu0 0
        %773 = vmatpush1.bf16.msra.mxu0 0
        %774 = vmatprep.subr.bf16.mxu0 0
        %775 = vmatpush1.bf16.msra.mxu0 0
        %776 = vmatprep.subr.bf16.mxu0 0
        %777 = vmatpush1.bf16.msra.mxu0 0
        %778 = vmatprep.subr.bf16.mxu0 0
        %779 = vmatpush1.bf16.msra.mxu0 0
        %780 = vmatprep.subr.bf16.mxu0 0
        %781 = vmatpush1.bf16.msra.mxu0 0
        %782 = vmatprep.mubr.bf16.mxu0 0
        %783 = vmatmul.mubr.bf16.gmra.mrb[0].mxu0 %v748
        %v784 = vpop.f32.mrb[0].mxu0
        %v785 = vadd.f32 0.0, %v784
        %v786 = vpop.f32.mrb[0].mxu0
        %v787 = vadd.f32 0.0, %v786
        %v788 = vpop.f32.mrb[0].mxu0
        %v789 = vpop.f32.mrb[0].mxu0
        %790 = vdwg.mxu0
        %v791 = vadd.f32 %v528, %v785
        %v792 = vadd.f32 %v530, %v787
        %v793 = vxor.u32 %v791, 2147483648
        %v794 = vxor.u32 %v792, 2147483648
        %v795 = vmul.f32 %v793, 1.442695
        %v796 = vpow.pop %v795
        %v797 = vmul.f32 %v794, 1.442695
        %v798 = vpow.pop %v797
        %v799 = vadd.f32 %v796, 1.0
        %v800 = vadd.f32 %v798, 1.0
        %v801 = vrcp.pop %v799
        %v802 = vmul.f32 1.0, %v801
        %v803 = vrcp.pop %v800
        %v804 = vmul.f32 1.0, %v803
        %v805 = vtanh.pop %v792
        %v806 = vmul.f32 %v802, 0.0
        %808 = vrot.lane.b32.xlu0 %v805, 64
        %v809 = vpop.permute.xlu0 %808
        %v811 = vmul.f32 %v802, %v809
        %813 = vrot.lane.b32.xlu0 %v811, 64
        %v814 = vpop.permute.xlu0 %813
        %v816 = vadd.f32 %v806, %v814
        %v817 = vtanh.pop %v816
        %819 = vrot.lane.b32.xlu0 %v817, 64
        %v820 = vpop.permute.xlu0 %819
        %v822 = vmul.f32 %v804, %v820
        %v823 = vpack.c.bf16 %v822, %v822
        %v825 = vsel %vm746, %v823, 0
        %827 = vmatprep.subr.bf16.mxu0 %v731
        %828 = vmatpush1.bf16.msra.mxu0 %v730
        %829 = vmatprep.subr.bf16.mxu0 %v733
        %830 = vmatpush1.bf16.msra.mxu0 %v732
        %831 = vmatprep.subr.bf16.mxu0 %v735
        %832 = vmatpush1.bf16.msra.mxu0 %v734
        %833 = vmatprep.subr.bf16.mxu0 %v737
        %834 = vmatpush1.bf16.msra.mxu0 %v736
        %835 = vmatprep.subr.bf16.mxu0 0
        %836 = vmatpush1.bf16.msra.mxu0 0
        %837 = vmatprep.subr.bf16.mxu0 0
        %838 = vmatpush1.bf16.msra.mxu0 0
        %839 = vmatprep.subr.bf16.mxu0 0
        %840 = vmatpush1.bf16.msra.mxu0 0
        %841 = vmatprep.subr.bf16.mxu0 0
        %842 = vmatpush1.bf16.msra.mxu0 0
        %843 = vmatprep.subr.bf16.mxu0 0
        %844 = vmatpush1.bf16.msra.mxu0 0
        %845 = vmatprep.subr.bf16.mxu0 0
        %846 = vmatpush1.bf16.msra.mxu0 0
        %847 = vmatprep.subr.bf16.mxu0 0
        %848 = vmatpush1.bf16.msra.mxu0 0
        %849 = vmatprep.subr.bf16.mxu0 0
        %850 = vmatpush1.bf16.msra.mxu0 0
        %851 = vmatprep.subr.bf16.mxu0 0
        %852 = vmatpush1.bf16.msra.mxu0 0
        %853 = vmatprep.subr.bf16.mxu0 0
        %854 = vmatpush1.bf16.msra.mxu0 0
        %855 = vmatprep.subr.bf16.mxu0 0
        %856 = vmatpush1.bf16.msra.mxu0 0
        %857 = vmatprep.subr.bf16.mxu0 0
        %858 = vmatpush1.bf16.msra.mxu0 0
        %859 = vmatprep.mubr.bf16.mxu0 0
        %860 = vmatmul.mubr.bf16.gmra.mrb[0].mxu0 %v825
        %v861 = vpop.f32.mrb[0].mxu0
        %v862 = vadd.f32 0.0, %v861
        %v863 = vpop.f32.mrb[0].mxu0
        %v864 = vadd.f32 0.0, %v863
        %v865 = vpop.f32.mrb[0].mxu0
        %v866 = vpop.f32.mrb[0].mxu0
        %867 = vdwg.mxu0
        %v868 = vadd.f32 %v569, %v862
        %v869 = vadd.f32 %v571, %v864
        %v870 = vxor.u32 %v868, 2147483648
        %v871 = vxor.u32 %v869, 2147483648
        %v872 = vmul.f32 %v870, 1.442695
        %v873 = vpow.pop %v872
        %v874 = vmul.f32 %v871, 1.442695
        %v875 = vpow.pop %v874
        %v876 = vadd.f32 %v873, 1.0
        %v877 = vadd.f32 %v875, 1.0
        %v878 = vrcp.pop %v876
        %v879 = vmul.f32 1.0, %v878
        %v880 = vrcp.pop %v877
        %v881 = vmul.f32 1.0, %v880
        %v882 = vtanh.pop %v869
        %v883 = vmul.f32 %v879, %v816
        %885 = vrot.lane.b32.xlu0 %v882, 64
        %v886 = vpop.permute.xlu0 %885
        %v888 = vmul.f32 %v879, %v886
        %890 = vrot.lane.b32.xlu0 %v888, 64
        %v891 = vpop.permute.xlu0 %890
        %v893 = vadd.f32 %v883, %v891
        %v894 = vtanh.pop %v893
        %896 = vrot.lane.b32.xlu0 %v894, 64
        %v897 = vpop.permute.xlu0 %896
        %v899 = vmul.f32 %v881, %v897
        %v900 = vpack.c.bf16 %v899, %v899
        %v902 = vsel %vm746, %v900, 0
        %904 = vmatprep.subr.bf16.mxu0 %v731
        %905 = vmatpush1.bf16.msra.mxu0 %v730
        %906 = vmatprep.subr.bf16.mxu0 %v733
        %907 = vmatpush1.bf16.msra.mxu0 %v732
        %908 = vmatprep.subr.bf16.mxu0 %v735
        %909 = vmatpush1.bf16.msra.mxu0 %v734
        %910 = vmatprep.subr.bf16.mxu0 %v737
        %911 = vmatpush1.bf16.msra.mxu0 %v736
        %912 = vmatprep.subr.bf16.mxu0 0
        %913 = vmatpush1.bf16.msra.mxu0 0
        %914 = vmatprep.subr.bf16.mxu0 0
        %915 = vmatpush1.bf16.msra.mxu0 0
        %916 = vmatprep.subr.bf16.mxu0 0
        %917 = vmatpush1.bf16.msra.mxu0 0
        %918 = vmatprep.subr.bf16.mxu0 0
        %919 = vmatpush1.bf16.msra.mxu0 0
        %920 = vmatprep.subr.bf16.mxu0 0
        %921 = vmatpush1.bf16.msra.mxu0 0
        %922 = vmatprep.subr.bf16.mxu0 0
        %923 = vmatpush1.bf16.msra.mxu0 0
        %924 = vmatprep.subr.bf16.mxu0 0
        %925 = vmatpush1.bf16.msra.mxu0 0
        %926 = vmatprep.subr.bf16.mxu0 0
        %927 = vmatpush1.bf16.msra.mxu0 0
        %928 = vmatprep.subr.bf16.mxu0 0
        %929 = vmatpush1.bf16.msra.mxu0 0
        %930 = vmatprep.subr.bf16.mxu0 0
        %931 = vmatpush1.bf16.msra.mxu0 0
        %932 = vmatprep.subr.bf16.mxu0 0
        %933 = vmatpush1.bf16.msra.mxu0 0
        %934 = vmatprep.subr.bf16.mxu0 0
        %935 = vmatpush1.bf16.msra.mxu0 0
        %936 = vmatprep.mubr.bf16.mxu0 0
        %937 = vmatmul.mubr.bf16.gmra.mrb[0].mxu0 %v902
        %v938 = vpop.f32.mrb[0].mxu0
        %v939 = vadd.f32 0.0, %v938
        %v940 = vpop.f32.mrb[0].mxu0
        %v941 = vadd.f32 0.0, %v940
        %v942 = vpop.f32.mrb[0].mxu0
        %v943 = vpop.f32.mrb[0].mxu0
        %944 = vdwg.mxu0
        %v945 = vadd.f32 %v610, %v939
        %v946 = vadd.f32 %v612, %v941
        %v947 = vxor.u32 %v945, 2147483648
        %v948 = vxor.u32 %v946, 2147483648
        %v949 = vmul.f32 %v947, 1.442695
        %v950 = vpow.pop %v949
        %v951 = vmul.f32 %v948, 1.442695
        %v952 = vpow.pop %v951
        %v953 = vadd.f32 %v950, 1.0
        %v954 = vadd.f32 %v952, 1.0
        %v955 = vrcp.pop %v953
        %v956 = vmul.f32 1.0, %v955
        %v957 = vrcp.pop %v954
        %v958 = vmul.f32 1.0, %v957
        %v959 = vtanh.pop %v946
        %v960 = vmul.f32 %v956, %v893
        %962 = vrot.lane.b32.xlu0 %v959, 64
        %v963 = vpop.permute.xlu0 %962
        %v965 = vmul.f32 %v956, %v963
        %967 = vrot.lane.b32.xlu0 %v965, 64
        %v968 = vpop.permute.xlu0 %967
        %v970 = vadd.f32 %v960, %v968
        %v971 = vtanh.pop %v970
        %973 = vrot.lane.b32.xlu0 %v971, 64
        %v974 = vpop.permute.xlu0 %973
        %v976 = vmul.f32 %v958, %v974
        %v977 = vpack.c.bf16 %v976, %v976
        %v979 = vsel %vm746, %v977, 0
        %981 = vmatprep.subr.bf16.mxu0 %v731
        %982 = vmatpush1.bf16.msra.mxu0 %v730
        %983 = vmatprep.subr.bf16.mxu0 %v733
        %984 = vmatpush1.bf16.msra.mxu0 %v732
        %985 = vmatprep.subr.bf16.mxu0 %v735
        %986 = vmatpush1.bf16.msra.mxu0 %v734
        %987 = vmatprep.subr.bf16.mxu0 %v737
        %988 = vmatpush1.bf16.msra.mxu0 %v736
        %989 = vmatprep.subr.bf16.mxu0 0
        %990 = vmatpush1.bf16.msra.mxu0 0
        %991 = vmatprep.subr.bf16.mxu0 0
        %992 = vmatpush1.bf16.msra.mxu0 0
        %993 = vmatprep.subr.bf16.mxu0 0
        %994 = vmatpush1.bf16.msra.mxu0 0
        %995 = vmatprep.subr.bf16.mxu0 0
        %996 = vmatpush1.bf16.msra.mxu0 0
        %997 = vmatprep.subr.bf16.mxu0 0
        %998 = vmatpush1.bf16.msra.mxu0 0
        %999 = vmatprep.subr.bf16.mxu0 0
        %1000 = vmatpush1.bf16.msra.mxu0 0
        %1001 = vmatprep.subr.bf16.mxu0 0
        %1002 = vmatpush1.bf16.msra.mxu0 0
        %1003 = vmatprep.subr.bf16.mxu0 0
        %1004 = vmatpush1.bf16.msra.mxu0 0
        %1005 = vmatprep.subr.bf16.mxu0 0
        %1006 = vmatpush1.bf16.msra.mxu0 0
        %1007 = vmatprep.subr.bf16.mxu0 0
        %1008 = vmatpush1.bf16.msra.mxu0 0
        %1009 = vmatprep.subr.bf16.mxu0 0
        %1010 = vmatpush1.bf16.msra.mxu0 0
        %1011 = vmatprep.subr.bf16.mxu0 0
        %1012 = vmatpush1.bf16.msra.mxu0 0
        %1013 = vmatprep.mubr.bf16.mxu0 0
        %1014 = vmatmul.mubr.bf16.gmra.mrb[0].mxu0 %v979
        %v1015 = vpop.f32.mrb[0].mxu0
        %v1016 = vadd.f32 0.0, %v1015
        %v1017 = vpop.f32.mrb[0].mxu0
        %v1018 = vadd.f32 0.0, %v1017
        %v1019 = vpop.f32.mrb[0].mxu0
        %v1020 = vpop.f32.mrb[0].mxu0
        %1021 = vdwg.mxu0
        %v1022 = vadd.f32 %v651, %v1016
        %v1023 = vadd.f32 %v653, %v1018
        %v1024 = vxor.u32 %v1022, 2147483648
        %v1025 = vxor.u32 %v1023, 2147483648
        %v1026 = vmul.f32 %v1024, 1.442695
        %v1027 = vpow.pop %v1026
        %v1028 = vmul.f32 %v1025, 1.442695
        %v1029 = vpow.pop %v1028
        %v1030 = vadd.f32 %v1027, 1.0
        %v1031 = vadd.f32 %v1029, 1.0
        %v1032 = vrcp.pop %v1030
        %v1033 = vmul.f32 1.0, %v1032
        %v1034 = vrcp.pop %v1031
        %v1035 = vmul.f32 1.0, %v1034
        %v1036 = vtanh.pop %v1023
        %v1037 = vmul.f32 %v1033, %v970
        %1039 = vrot.lane.b32.xlu0 %v1036, 64
        %v1040 = vpop.permute.xlu0 %1039
        %v1042 = vmul.f32 %v1033, %v1040
        %1044 = vrot.lane.b32.xlu0 %v1042, 64
        %v1045 = vpop.permute.xlu0 %1044
        %v1047 = vadd.f32 %v1037, %v1045
        %v1048 = vtanh.pop %v1047
        %1050 = vrot.lane.b32.xlu0 %v1048, 64
        %v1051 = vpop.permute.xlu0 %1050
        %v1053 = vmul.f32 %v1035, %v1051
        %v1054 = vpack.c.bf16 %v1053, %v1053
        %v1056 = vsel %vm746, %v1054, 0
        %1058 = vmatprep.subr.bf16.mxu0 %v731
        %1059 = vmatpush1.bf16.msra.mxu0 %v730
        %1060 = vmatprep.subr.bf16.mxu0 %v733
        %1061 = vmatpush1.bf16.msra.mxu0 %v732
        %1062 = vmatprep.subr.bf16.mxu0 %v735
        %1063 = vmatpush1.bf16.msra.mxu0 %v734
        %1064 = vmatprep.subr.bf16.mxu0 %v737
        %1065 = vmatpush1.bf16.msra.mxu0 %v736
        %1066 = vmatprep.subr.bf16.mxu0 0
        %1067 = vmatpush1.bf16.msra.mxu0 0
        %1068 = vmatprep.subr.bf16.mxu0 0
        %1069 = vmatpush1.bf16.msra.mxu0 0
        %1070 = vmatprep.subr.bf16.mxu0 0
        %1071 = vmatpush1.bf16.msra.mxu0 0
        %1072 = vmatprep.subr.bf16.mxu0 0
        %1073 = vmatpush1.bf16.msra.mxu0 0
        %1074 = vmatprep.subr.bf16.mxu0 0
        %1075 = vmatpush1.bf16.msra.mxu0 0
        %1076 = vmatprep.subr.bf16.mxu0 0
        %1077 = vmatpush1.bf16.msra.mxu0 0
        %1078 = vmatprep.subr.bf16.mxu0 0
        %1079 = vmatpush1.bf16.msra.mxu0 0
        %1080 = vmatprep.subr.bf16.mxu0 0
        %1081 = vmatpush1.bf16.msra.mxu0 0
        %1082 = vmatprep.subr.bf16.mxu0 0
        %1083 = vmatpush1.bf16.msra.mxu0 0
        %1084 = vmatprep.subr.bf16.mxu0 0
        %1085 = vmatpush1.bf16.msra.mxu0 0
        %1086 = vmatprep.subr.bf16.mxu0 0
        %1087 = vmatpush1.bf16.msra.mxu0 0
        %1088 = vmatprep.subr.bf16.mxu0 0
        %1089 = vmatpush1.bf16.msra.mxu0 0
        %1090 = vmatprep.mubr.bf16.mxu0 0
        %1091 = vmatmul.mubr.bf16.gmra.mrb[0].mxu0 %v1056
        %v1092 = vpop.f32.mrb[0].mxu0
        %v1093 = vadd.f32 0.0, %v1092
        %v1094 = vpop.f32.mrb[0].mxu0
        %v1095 = vadd.f32 0.0, %v1094
        %v1096 = vpop.f32.mrb[0].mxu0
        %v1097 = vpop.f32.mrb[0].mxu0
        %1098 = vdwg.mxu0
        %v1099 = vadd.f32 %v692, %v1093
        %v1100 = vadd.f32 %v694, %v1095
        %v1101 = vxor.u32 %v1099, 2147483648
        %v1102 = vxor.u32 %v1100, 2147483648
        %v1103 = vmul.f32 %v1101, 1.442695
        %v1104 = vpow.pop %v1103
        %v1105 = vmul.f32 %v1102, 1.442695
        %v1106 = vpow.pop %v1105
        %v1107 = vadd.f32 %v1104, 1.0
        %v1108 = vadd.f32 %v1106, 1.0
        %v1109 = vrcp.pop %v1107
        %v1110 = vmul.f32 1.0, %v1109
        %v1111 = vrcp.pop %v1108
        %v1112 = vmul.f32 1.0, %v1111
        %v1113 = vtanh.pop %v1100
        %v1114 = vmul.f32 %v1110, %v1047
        %1116 = vrot.lane.b32.xlu0 %v1113, 64
        %v1117 = vpop.permute.xlu0 %1116
        %v1119 = vmul.f32 %v1110, %v1117
        %1121 = vrot.lane.b32.xlu0 %v1119, 64
        %v1122 = vpop.permute.xlu0 %1121
        %v1124 = vadd.f32 %v1114, %v1122
        %v1125 = vtanh.pop %v1124
        %1127 = vrot.lane.b32.xlu0 %v1125, 64
        %v1128 = vpop.permute.xlu0 %1127
        %v1130 = vmul.f32 %v1112, %v1128
        %1132 = vrot.lane.b32.xlu0 %v1130, 32
        %v1133 = vpop.permute.xlu0 %1132
        %1135 = vrot.lane.b32.xlu0 %v1130, 64
        %v1136 = vpop.permute.xlu0 %1135
        %1139 = vrot.lane.b32.xlu0 %v1124, 32
        %v1140 = vpop.permute.xlu0 %1139
        %vm1142 = vcmask 261120
        %v1143 = vsel %vm1142, %v1130, %v822
        %v1144 = vsel %vm746, %v1143, %v1133
        %vm1145 = vcmask 785408
        %v1146 = vsel %vm1145, %v1144, %v1124
        %v1147 = vsel %vm1142, %v822, %v1130
        %v1148 = vsel %vm746, %v1147, %v1136
        %v1149 = vsel %vm1145, %v1148, %v1140
        %v1150 = vpack.c.bf16 %v1146, %v1146
        %v1151 = vpack.c.bf16 %v1149, %v1149
        %v1152 = vld [vmem:[%s3] sm:$0xf]
        %v1153 = vld [vmem:[%s3 + $0x4] sm:$0xf]
        %v1154 = vld [vmem:[%s3 + $0x8] sm:$0xf]
        %v1155 = vld [vmem:[%s3 + $0xc] sm:$0xf]
        %v1156 = vld [vmem:[%s3 + $0x10] sm:$0xf]
        %v1157 = vld [vmem:[%s3 + $0x14] sm:$0xf]
        %v1158 = vld [vmem:[%s3 + $0x18] sm:$0xf]
        %v1159 = vld [vmem:[%s3 + $0x1c] sm:$0xf]
        %v1160 = vld [vmem:[%s3 + $0x20] sm:$0xf]
        %v1161 = vld [vmem:[%s3 + $0x24] sm:$0xf]
        %v1162 = vld [vmem:[%s3 + $0x28] sm:$0xf]
        %v1163 = vld [vmem:[%s3 + $0x2c] sm:$0xf]
        %v1164 = vld [vmem:[%s3 + $0x30] sm:$0xf]
        %v1165 = vld [vmem:[%s3 + $0x34] sm:$0xf]
        %v1166 = vld [vmem:[%s3 + $0x38] sm:$0xf]
        %v1167 = vld [vmem:[%s3 + $0x3c] sm:$0xf]
        %v1168 = vld [vmem:[%s3 + $0x40] sm:$0xf]
        %v1169 = vld [vmem:[%s3 + $0x44] sm:$0xf]
        %v1170 = vld [vmem:[%s3 + $0x48] sm:$0xf]
        %v1171 = vld [vmem:[%s3 + $0x4c] sm:$0xf]
        %v1172 = vld [vmem:[%s3 + $0x50] sm:$0xf]
        %v1173 = vld [vmem:[%s3 + $0x54] sm:$0xf]
        %v1174 = vld [vmem:[%s3 + $0x58] sm:$0xf]
        %v1175 = vld [vmem:[%s3 + $0x5c] sm:$0xf]
        %v1176 = vld [vmem:[%s3 + $0x60] sm:$0xf]
        %v1177 = vld [vmem:[%s3 + $0x64] sm:$0xf]
        %v1178 = vld [vmem:[%s3 + $0x68] sm:$0xf]
        %v1179 = vld [vmem:[%s3 + $0x6c] sm:$0xf]
        %v1180 = vld [vmem:[%s3 + $0x70] sm:$0xf]
        %v1181 = vld [vmem:[%s3 + $0x74] sm:$0xf]
        %v1182 = vld [vmem:[%s3 + $0x78] sm:$0xf]
        %v1183 = vld [vmem:[%s3 + $0x7c] sm:$0xf]
        %v1184 = vld [vmem:[%s4] sm:$0x1]
        %v1186 = vlaneseq
        %v1187 = vshrl.u32 %v1186, 7
        %v1188 = vsub.s32 0, %v1187
        %v1189 = vrot.slane %v1184, %v1188
        %v1223 = vunpack.c.l.b16 %v1152
        %v1224 = vunpack.c.l.b16 %v1153
        %v1225 = vunpack.c.l.b16 %v1154
        %v1226 = vunpack.c.l.b16 %v1155
        %v1227 = vunpack.c.l.b16 %v1156
        %v1228 = vunpack.c.l.b16 %v1157
        %v1229 = vunpack.c.l.b16 %v1158
        %v1230 = vunpack.c.l.b16 %v1159
        %v1231 = vunpack.c.l.b16 %v1160
        %v1232 = vunpack.c.l.b16 %v1161
        %v1233 = vunpack.c.l.b16 %v1162
        %v1234 = vunpack.c.l.b16 %v1163
        %v1235 = vunpack.c.l.b16 %v1164
        %v1236 = vunpack.c.l.b16 %v1165
        %v1237 = vunpack.c.l.b16 %v1166
        %v1238 = vunpack.c.l.b16 %v1167
        %v1239 = vunpack.c.l.b16 %v1168
        %v1240 = vunpack.c.l.b16 %v1169
        %v1241 = vunpack.c.l.b16 %v1170
        %v1242 = vunpack.c.l.b16 %v1171
        %v1243 = vunpack.c.l.b16 %v1172
        %v1244 = vunpack.c.l.b16 %v1173
        %v1245 = vunpack.c.l.b16 %v1174
        %v1246 = vunpack.c.l.b16 %v1175
        %v1247 = vunpack.c.l.b16 %v1176
        %v1248 = vunpack.c.l.b16 %v1177
        %v1249 = vunpack.c.l.b16 %v1178
        %v1250 = vunpack.c.l.b16 %v1179
        %v1251 = vunpack.c.l.b16 %v1180
        %v1252 = vunpack.c.l.b16 %v1181
        %v1253 = vunpack.c.l.b16 %v1182
        %v1254 = vunpack.c.l.b16 %v1183
        %v1255 = vpack.c.b16 %v1224, %v1223
        %v1256 = vpack.c.b16 %v1226, %v1225
        %v1257 = vpack.c.b16 %v1228, %v1227
        %v1258 = vpack.c.b16 %v1230, %v1229
        %v1259 = vpack.c.b16 %v1232, %v1231
        %v1260 = vpack.c.b16 %v1234, %v1233
        %v1261 = vpack.c.b16 %v1236, %v1235
        %v1262 = vpack.c.b16 %v1238, %v1237
        %v1263 = vpack.c.b16 %v1240, %v1239
        %v1264 = vpack.c.b16 %v1242, %v1241
        %v1265 = vpack.c.b16 %v1244, %v1243
        %v1266 = vpack.c.b16 %v1246, %v1245
        %v1267 = vpack.c.b16 %v1248, %v1247
        %v1268 = vpack.c.b16 %v1250, %v1249
        %v1269 = vpack.c.b16 %v1252, %v1251
        %v1270 = vpack.c.b16 %v1254, %v1253
        %1287 = vmatprep.subr.bf16.mxu0 0
        %1288 = vmatpush1.bf16.msra.mxu0 %v1255
        %1289 = vmatprep.subr.bf16.mxu0 0
        %1290 = vmatpush1.bf16.msra.mxu0 %v1256
        %1291 = vmatprep.subr.bf16.mxu0 0
        %1292 = vmatpush1.bf16.msra.mxu0 %v1257
        %1293 = vmatprep.subr.bf16.mxu0 0
        %1294 = vmatpush1.bf16.msra.mxu0 %v1258
        %1295 = vmatprep.subr.bf16.mxu0 0
        %1296 = vmatpush1.bf16.msra.mxu0 %v1259
        %1297 = vmatprep.subr.bf16.mxu0 0
        %1298 = vmatpush1.bf16.msra.mxu0 %v1260
        %1299 = vmatprep.subr.bf16.mxu0 0
        %1300 = vmatpush1.bf16.msra.mxu0 %v1261
        %1301 = vmatprep.subr.bf16.mxu0 0
        %1302 = vmatpush1.bf16.msra.mxu0 %v1262
        %1303 = vmatprep.subr.bf16.mxu0 0
        %1304 = vmatpush1.bf16.msra.mxu0 %v1263
        %1305 = vmatprep.subr.bf16.mxu0 0
        %1306 = vmatpush1.bf16.msra.mxu0 %v1264
        %1307 = vmatprep.subr.bf16.mxu0 0
        %1308 = vmatpush1.bf16.msra.mxu0 %v1265
        %1309 = vmatprep.subr.bf16.mxu0 0
        %1310 = vmatpush1.bf16.msra.mxu0 %v1266
        %1311 = vmatprep.subr.bf16.mxu0 0
        %1312 = vmatpush1.bf16.msra.mxu0 %v1267
        %1313 = vmatprep.subr.bf16.mxu0 0
        %1314 = vmatpush1.bf16.msra.mxu0 %v1268
        %1315 = vmatprep.subr.bf16.mxu0 0
        %1316 = vmatpush1.bf16.msra.mxu0 %v1269
        %1317 = vmatprep.subr.bf16.mxu0 0
        %1318 = vmatpush1.bf16.msra.mxu0 %v1270
        %1319 = vmatprep.mubr.bf16.mxu0 %v1151
        %1320 = vmatmul.mubr.bf16.gmra.mrb[0].mxu0 %v1150
        %v1321 = vpop.f32.mrb[0].mxu0
        %v1322 = vadd.f32 %v1189, %v1321
        %v1323 = vpop.f32.mrb[0].mxu0
        %v1324 = vpop.f32.mrb[0].mxu0
        %v1325 = vpop.f32.mrb[0].mxu0
        %1326 = vdwg.mxu0
        %v1327 = vmax.f32 %v1322, 0.0
        %v1328 = vpack.c.bf16 %v1327, %v1327
        %v1329 = vld [vmem:[%s5] sm:$0xf]
        %v1330 = vld [vmem:[%s5 + $0x4] sm:$0xf]
        %v1331 = vld [vmem:[%s5 + $0x8] sm:$0xf]
        %v1332 = vld [vmem:[%s5 + $0xc] sm:$0xf]
        %v1333 = vld [vmem:[%s6] sm:$0x1]
        %v1335 = vlaneseq
        %v1336 = vshrl.u32 %v1335, 7
        %v1337 = vsub.s32 0, %v1336
        %v1338 = vrot.slane %v1333, %v1337
        %v1344 = vunpack.c.l.b16 %v1329
        %v1345 = vunpack.c.l.b16 %v1330
        %v1346 = vunpack.c.l.b16 %v1331
        %v1347 = vunpack.c.l.b16 %v1332
        %v1348 = vpack.c.b16 %v1345, %v1344
        %v1349 = vpack.c.b16 %v1347, %v1346
        %v1353 = vsel %vm1142, %v1328, 0
        %1355 = vmatprep.subr.bf16.mxu0 0
        %1356 = vmatpush1.bf16.msra.mxu0 %v1348
        %1357 = vmatprep.subr.bf16.mxu0 0
        %1358 = vmatpush1.bf16.msra.mxu0 %v1349
        %1359 = vmatprep.subr.bf16.mxu0 0
        %1360 = vmatpush1.bf16.msra.mxu0 0
        %1361 = vmatprep.subr.bf16.mxu0 0
        %1362 = vmatpush1.bf16.msra.mxu0 0
        %1363 = vmatprep.subr.bf16.mxu0 0
        %1364 = vmatpush1.bf16.msra.mxu0 0
        %1365 = vmatprep.subr.bf16.mxu0 0
        %1366 = vmatpush1.bf16.msra.mxu0 0
        %1367 = vmatprep.subr.bf16.mxu0 0
        %1368 = vmatpush1.bf16.msra.mxu0 0
        %1369 = vmatprep.subr.bf16.mxu0 0
        %1370 = vmatpush1.bf16.msra.mxu0 0
        %1371 = vmatprep.subr.bf16.mxu0 0
        %1372 = vmatpush1.bf16.msra.mxu0 0
        %1373 = vmatprep.subr.bf16.mxu0 0
        %1374 = vmatpush1.bf16.msra.mxu0 0
        %1375 = vmatprep.subr.bf16.mxu0 0
        %1376 = vmatpush1.bf16.msra.mxu0 0
        %1377 = vmatprep.subr.bf16.mxu0 0
        %1378 = vmatpush1.bf16.msra.mxu0 0
        %1379 = vmatprep.subr.bf16.mxu0 0
        %1380 = vmatpush1.bf16.msra.mxu0 0
        %1381 = vmatprep.subr.bf16.mxu0 0
        %1382 = vmatpush1.bf16.msra.mxu0 0
        %1383 = vmatprep.subr.bf16.mxu0 0
        %1384 = vmatpush1.bf16.msra.mxu0 0
        %1385 = vmatprep.subr.bf16.mxu0 0
        %1386 = vmatpush1.bf16.msra.mxu0 0
        %1387 = vmatprep.mubr.bf16.mxu0 0
        %1388 = vmatmul.mubr.bf16.gmra.mrb[0].mxu0 %v1353
        %v1389 = vpop.f32.mrb[0].mxu0
        %v1390 = vadd.f32 %v1338, %v1389
        %v1391 = vpop.f32.mrb[0].mxu0
        %v1392 = vpop.f32.mrb[0].mxu0
        %v1393 = vpop.f32.mrb[0].mxu0
        %1394 = vdwg.mxu0
        %v1395 = vmax.f32 %v1390, 0.0
        %v1396 = vpack.c.bf16 %v1395, %v1395
        %v1397 = vld [vmem:[%s7] sm:$0xf]
        %v1398 = vld [vmem:[%s7 + $0x4] sm:$0xf]
        %v1399 = vld [vmem:[%s7 + $0x8] sm:$0xf]
        %v1400 = vld [vmem:[%s7 + $0xc] sm:$0xf]
        %v1401 = vld [vmem:[%s8] sm:$0x1]
        %v1403 = vlaneseq
        %v1404 = vshrl.u32 %v1403, 7
        %v1405 = vsub.s32 0, %v1404
        %v1406 = vrot.slane %v1401, %v1405
        %v1412 = vunpack.c.l.b16 %v1397
        %v1413 = vunpack.c.l.b16 %v1398
        %v1414 = vunpack.c.l.b16 %v1399
        %v1415 = vunpack.c.l.b16 %v1400
        %v1416 = vpack.c.b16 %v1413, %v1412
        %v1417 = vpack.c.b16 %v1415, %v1414
        %v1421 = vsel %vm1142, %v1396, 0
        %1423 = vmatprep.subr.bf16.mxu0 0
        %1424 = vmatpush1.bf16.msra.mxu0 %v1416
        %1425 = vmatprep.subr.bf16.mxu0 0
        %1426 = vmatpush1.bf16.msra.mxu0 %v1417
        %1427 = vmatprep.subr.bf16.mxu0 0
        %1428 = vmatpush1.bf16.msra.mxu0 0
        %1429 = vmatprep.subr.bf16.mxu0 0
        %1430 = vmatpush1.bf16.msra.mxu0 0
        %1431 = vmatprep.subr.bf16.mxu0 0
        %1432 = vmatpush1.bf16.msra.mxu0 0
        %1433 = vmatprep.subr.bf16.mxu0 0
        %1434 = vmatpush1.bf16.msra.mxu0 0
        %1435 = vmatprep.subr.bf16.mxu0 0
        %1436 = vmatpush1.bf16.msra.mxu0 0
        %1437 = vmatprep.subr.bf16.mxu0 0
        %1438 = vmatpush1.bf16.msra.mxu0 0
        %1439 = vmatprep.subr.bf16.mxu0 0
        %1440 = vmatpush1.bf16.msra.mxu0 0
        %1441 = vmatprep.subr.bf16.mxu0 0
        %1442 = vmatpush1.bf16.msra.mxu0 0
        %1443 = vmatprep.subr.bf16.mxu0 0
        %1444 = vmatpush1.bf16.msra.mxu0 0
        %1445 = vmatprep.subr.bf16.mxu0 0
        %1446 = vmatpush1.bf16.msra.mxu0 0
        %1447 = vmatprep.subr.bf16.mxu0 0
        %1448 = vmatpush1.bf16.msra.mxu0 0
        %1449 = vmatprep.subr.bf16.mxu0 0
        %1450 = vmatpush1.bf16.msra.mxu0 0
        %1451 = vmatprep.subr.bf16.mxu0 0
        %1452 = vmatpush1.bf16.msra.mxu0 0
        %1453 = vmatprep.subr.bf16.mxu0 0
        %1454 = vmatpush1.bf16.msra.mxu0 0
        %1455 = vmatprep.mubr.bf16.mxu0 0
        %1456 = vmatmul.mubr.bf16.gmra.mrb[0].mxu0 %v1421
        %v1457 = vpop.f32.mrb[0].mxu0
        %v1458 = vadd.f32 %v1406, %v1457
        %v1459 = vpop.f32.mrb[0].mxu0
        %v1460 = vpop.f32.mrb[0].mxu0
        %v1461 = vpop.f32.mrb[0].mxu0
        %1462 = vdwg.mxu0
        %1463 = vst [vmem:[%s342] sm:$0xff] %v1458
        %p1464 = scmp.lt.s32.totalorder %s21, 1
        %s1465 = scalar_select %p1464, %s21, 1
        %s1466 = smul.addr %s1465, 8
        %s1467 = scalar_lea.vmem %s9, %s1466
        // Predicated region
        $region61: #{hits_lstm_forward.1} parent=55 // pred_check
          %p1468 = pneg %p233
        $region62: #{hits_lstm_forward.1} parent=55 // pred_check_branch
          %1470 = sbr.rel (%p1468) target = $region64
        $region63: #{hits_lstm_forward.1} parent=55 // pred_region
          _
        $region64: #{hits_lstm_forward.1} parent=55 // pred_fallthru
          _
      $region56: #{hits_lstm_forward.1} parent=5 // pred_fallthru
        _
      %p1471 = scmp.le.s32.totalorder 2, %s16
      // Predicated region
      $region65: #{hits_lstm_forward.1} parent=5 // pred_check
        %p1472 = pneg %p1471
      $region66: #{hits_lstm_forward.1} parent=5 // pred_check_branch
        %1474 = sbr.rel (%p1472) target = $region68
      $region67: #{hits_lstm_forward.1} parent=5 // pred_region
        %s1475 = ssub.s32 %s16, 2
        // Predicated region
        $region69: #{hits_lstm_forward.1} parent=67 // pred_check
          %p1476 = pneg %p239
        $region70: #{hits_lstm_forward.1} parent=67 // pred_check_branch
          %1478 = sbr.rel (%p1476) target = $region72
        $region71: #{hits_lstm_forward.1} parent=67 // pred_region
          %p1479 = scmp.lt.s32.totalorder %s22, 1
          %s1480 = scalar_select %p1479, %s22, 1
          %s1481 = smul.addr %s1480, 8
          %s1482 = scalar_lea.vmem %s9, %s1481
        $region72: #{hits_lstm_forward.1} parent=67 // pred_fallthru
          _
      $region68: #{hits_lstm_forward.1} parent=5 // pred_fallthru
        _
    $region6: #{hits_lstm_forward.1} parent=1 // loop_footer
      %s20 = sadd.s32 1, %s16
    $region7: #{hits_lstm_forward.1} parent=1 // loop_footer_branch
      %15 = sbr.rel target = $region3
    $region8: #{hits_lstm_forward.1} parent=1 // loop_exit
      _
    %1483 = vsyncpa [#allocation3], 1
    %s1484 = scalar_lea.sflag [#allocation3], 1
    %1485 = vsyncpa %s1484, 1

</llo_original>
